<compile_context>
chip_gen: v7x
topology: tpu7x:2x2x1
jax: 0.10.0
libtpu: 0.0.40
codegen_flags: <defaults>
</compile_context>

<pallas_src>
import functools
import math

import jax
import jax.numpy as jnp
from jax import lax
from jax.experimental import pallas as pl
from jax.experimental.pallas import tpu as pltpu


def _attend_out_norm(q_tile, k_all, v_all, xp_tile, wo, bo, gamma, beta, *,
                     num_heads, scale, eps, cd, approx_recip, out_dtype):
    """Multi-head attention on one query tile + out_proj + residual + LayerNorm."""
    E = k_all.shape[-1]
    hd = E // num_heads
    heads = []
    for h in range(num_heads):                                   # static unroll
        lo, hi = h * hd, (h + 1) * hd
        qh = q_tile[:, lo:hi]                                    # (tq, hd)
        kh = k_all[:, lo:hi]                                     # (S, hd)
        vh = v_all[:, lo:hi]                                     # (S, hd)
        # contract last dim of both operands -> no materialized transpose
        s = lax.dot_general(qh, kh, (((1,), (1,)), ((), ())),
                            preferred_element_type=jnp.float32) * scale
        s = s - jnp.max(s, axis=-1, keepdims=True)               # f32 softmax
        p = jnp.exp(s)
        denom = jnp.sum(p, axis=-1, keepdims=True)
        if approx_recip:
            p = p * pl.reciprocal(denom, approx=True)            # EUP, not VPU
        else:
            p = p / denom
        heads.append(jnp.dot(p.astype(cd), vh,
                             preferred_element_type=jnp.float32))  # (tq, hd)

    attn = jnp.concatenate(heads, axis=-1)                        # (tq, E) f32
    attn = jnp.dot(attn.astype(cd), wo,                           # single K=E matmul
                   preferred_element_type=jnp.float32) + bo

    y = attn + xp_tile                                            # residual (f32)
    mean = jnp.mean(y, axis=-1, keepdims=True)
    var = jnp.mean((y - mean) ** 2, axis=-1, keepdims=True)
    y = (y - mean) * lax.rsqrt(var + eps)
    y = y * gamma + beta
    return y.astype(out_dtype)


def attention_layer_kernel(x_ref, wlin_ref, blin_ref, wqkv_ref, bqkv_ref,
                           wo_ref, bo_ref, gamma_ref, beta_ref, o_ref, *scratch,
                           num_heads, eps, tq, compute_dtype, approx_recip,
                           single_tile):
    E = gamma_ref.shape[-1]
    hd = E // num_heads
    scale = 1.0 / math.sqrt(hd)
    cd = compute_dtype

    def project():
        # Linear(D_in -> E) followed by the fused QKV in_proj (E -> 3E).
        x = x_ref[...].astype(cd)                                         # (S, D_in)
        xp = jnp.dot(x, wlin_ref[...],
                     preferred_element_type=jnp.float32) + blin_ref[...]  # (S, E) f32
        qkv = jnp.dot(xp.astype(cd), wqkv_ref[...],
                      preferred_element_type=jnp.float32) + bqkv_ref[...]  # (S, 3E) f32
        return xp, qkv

    common = dict(num_heads=num_heads, scale=scale, eps=eps, cd=cd,
                  approx_recip=approx_recip, out_dtype=o_ref.dtype)

    if single_tile:
        # Fast path (n_q == 1): everything stays as in-register/VMEM values --
        # no scratch stores/loads and no pl.when cold path.
        xp, qkv = project()
        q_all = qkv[:, 0:E].astype(cd)
        k_all = qkv[:, E:2 * E].astype(cd)
        v_all = qkv[:, 2 * E:3 * E].astype(cd)
        o_ref[...] = _attend_out_norm(q_all, k_all, v_all, xp,
                                      wo_ref[...], bo_ref[...],
                                      gamma_ref[...], beta_ref[...], **common)
    else:
        xp_sc, q_sc, k_sc, v_sc = scratch
        qi = pl.program_id(1)

        # ---- once per batch element: projections into VMEM scratch ----
        @pl.when(qi == 0)
        def _():
            xp, qkv = project()
            xp_sc[...] = xp                                      # f32 residual copy
            q_sc[...] = qkv[:, 0:E].astype(cd)
            k_sc[...] = qkv[:, E:2 * E].astype(cd)
            v_sc[...] = qkv[:, 2 * E:3 * E].astype(cd)

        # ---- per query tile: attention + out_proj + residual + LayerNorm ----
        start = pl.multiple_of(qi * tq, tq)
        o_ref[...] = _attend_out_norm(q_sc[pl.ds(start, tq), :],
                                      k_sc[...], v_sc[...],
                                      xp_sc[pl.ds(start, tq), :],
                                      wo_ref[...], bo_ref[...],
                                      gamma_ref[...], beta_ref[...], **common)


def attention_layer(x, params, num_heads, *, eps=1e-5, tq=None,
                    compute_dtype=jnp.bfloat16):
    B, S, D_in = x.shape
    E = params["w_lin"].shape[0]
    assert E % num_heads == 0
    hd = E // num_heads

    if tq is None:
        tq = 128 if (S % 128 == 0) else S
    assert S % tq == 0 and (tq == S or tq % 8 == 0)
    n_q = S // tq
    single_tile = (n_q == 1)

    cd = jnp.dtype(compute_dtype)
    f32 = jnp.float32

    # Weight prep (transposes / casts) lives here so it is folded once under jit.
    w_lin = params["w_lin"].T.astype(cd)                            # (D_in, E)
    b_lin = params["b_lin"].reshape(1, E).astype(f32)
    w_qkv = params["in_proj_weight"].T.astype(cd)                   # (E, 3E) = [Wq|Wk|Wv]
    b_qkv = params["in_proj_bias"].reshape(1, 3 * E).astype(f32)
    w_o = params["out_proj_weight"].T.astype(cd)                    # (E, E)
    b_o = params["out_proj_bias"].reshape(1, E).astype(f32)
    gamma = params["gamma"].reshape(1, E).astype(f32)
    beta = params["beta"].reshape(1, E).astype(f32)

    args = (x.astype(cd), w_lin, b_lin, w_qkv, b_qkv, w_o, b_o, gamma, beta)

    if single_tile:
        grid = (B,)
        x_spec = pl.BlockSpec((None, S, D_in), lambda b: (b, 0, 0))
        const = lambda a: pl.BlockSpec(a.shape, lambda b: (0,) * a.ndim)
        out_spec = pl.BlockSpec((None, S, E), lambda b: (b, 0, 0))
        scratch_shapes = []
        dims = ("parallel",)
    else:
        grid = (B, n_q)
        x_spec = pl.BlockSpec((None, S, D_in), lambda b, q: (b, 0, 0))
        const = lambda a: pl.BlockSpec(a.shape, lambda b, q: (0,) * a.ndim)
        out_spec = pl.BlockSpec((None, tq, E), lambda b, q: (b, q, 0))
        scratch_shapes = [
            pltpu.VMEM((S, E), jnp.float32),   # xp (f32 residual)
            pltpu.VMEM((S, E), cd),            # Q
            pltpu.VMEM((S, E), cd),            # K
            pltpu.VMEM((S, E), cd),            # V
        ]
        dims = ("parallel", "arbitrary")

    in_specs = [x_spec] + [const(a) for a in args[1:]]

    kernel = functools.partial(
        attention_layer_kernel, num_heads=num_heads, eps=eps, tq=tq,
        compute_dtype=cd, approx_recip=(cd == jnp.bfloat16),
        single_tile=single_tile)

    flops = (2 * B * S * (D_in * E + 3 * E * E + E * E)
             + 4 * B * num_heads * S * S * hd)
    bytes_accessed = int(sum(int(a.size) * a.dtype.itemsize for a in args)
                         + B * S * E * 4)
    cost = pl.CostEstimate(flops=int(flops),
                           transcendentals=int(B * num_heads * S * S),
                           bytes_accessed=bytes_accessed)

    return pl.pallas_call(
        kernel,
        out_shape=jax.ShapeDtypeStruct((B, S, E), jnp.float32),
        grid_spec=pltpu.PrefetchScalarGridSpec(
            num_scalar_prefetch=0,
            grid=grid,
            in_specs=in_specs,
            out_specs=out_spec,
            scratch_shapes=scratch_shapes),
        compiler_params=pltpu.CompilerParams(dimension_semantics=dims),
        cost_estimate=cost,
    )(*args)


def reference(x, params, num_heads, eps=1e-5):
    """Pure-JAX (f32) re-implementation of the PyTorch forward pass."""
    xp = x @ params["w_lin"].T + params["b_lin"]
    B, S, E = xp.shape
    hd = E // num_heads
    wq, wk, wv = jnp.split(params["in_proj_weight"], 3, axis=0)
    bq, bk, bv = jnp.split(params["in_proj_bias"], 3, axis=0)
    q = xp @ wq.T + bq
    k = xp @ wk.T + bk
    v = xp @ wv.T + bv
    qh = q.reshape(B, S, num_heads, hd).transpose(0, 2, 1, 3)
    kh = k.reshape(B, S, num_heads, hd).transpose(0, 2, 1, 3)
    vh = v.reshape(B, S, num_heads, hd).transpose(0, 2, 1, 3)
    sc = jnp.einsum("bhqd,bhkd->bhqk", qh, kh) / jnp.sqrt(jnp.float32(hd))
    p = jax.nn.softmax(sc, axis=-1)
    o = jnp.einsum("bhqk,bhkd->bhqd", p, vh).transpose(0, 2, 1, 3).reshape(B, S, E)
    o = o @ params["out_proj_weight"].T + params["out_proj_bias"]
    y = o + xp
    mean = y.mean(-1, keepdims=True)
    var = ((y - mean) ** 2).mean(-1, keepdims=True)
    return (y - mean) / jnp.sqrt(var + eps) * params["gamma"] + params["beta"]


def init_params(key, input_dim, embed_dim):
    ks = jax.random.split(key, 6)
    s_lin = 1.0 / jnp.sqrt(jnp.float32(input_dim))
    s_emb = 1.0 / jnp.sqrt(jnp.float32(embed_dim))
    return {
        "w_lin": jax.random.uniform(ks[0], (embed_dim, input_dim),
                                    jnp.float32, -s_lin, s_lin),
        "b_lin": jax.random.uniform(ks[1], (embed_dim,),
                                    jnp.float32, -s_lin, s_lin),
        "in_proj_weight": jax.random.uniform(ks[2], (3 * embed_dim, embed_dim),
                                             jnp.float32, -s_emb, s_emb),
        "in_proj_bias": jnp.zeros((3 * embed_dim,), jnp.float32),
        "out_proj_weight": jax.random.uniform(ks[3], (embed_dim, embed_dim),
                                              jnp.float32, -s_emb, s_emb),
        "out_proj_bias": jnp.zeros((embed_dim,), jnp.float32),
        "gamma": jnp.ones((embed_dim,), jnp.float32),
        "beta": jnp.zeros((embed_dim,), jnp.float32),
    }


if __name__ == "__main__":
    B, S, INPUT_DIM, EMBED_DIM, NUM_HEADS = 2, 8, 16, 32, 4

    key = jax.random.PRNGKey(0)
    kx, kp, kx2 = jax.random.split(key, 3)
    x = jax.random.normal(kx, (B, S, INPUT_DIM), jnp.float32)
    params = init_params(kp, INPUT_DIM, EMBED_DIM)

    ref = reference(x, params, NUM_HEADS)

    # 1) Exactness: full-f32 compute path (single-tile fast path) vs f32 reference.
    fwd_f32 = jax.jit(functools.partial(attention_layer, num_heads=NUM_HEADS,
                                        compute_dtype=jnp.float32))
    out_f32 = jax.block_until_ready(fwd_f32(x, params))
    assert out_f32.shape == (B, S, EMBED_DIM)
    assert jnp.allclose(out_f32, ref, atol=1e-4, rtol=1e-4), \
        f"f32 path max abs err {jnp.max(jnp.abs(out_f32 - ref))}"

    # 2) Performance path: bf16 matmul operands, f32 accumulation / softmax / LN.
    fwd_bf16 = jax.jit(functools.partial(attention_layer, num_heads=NUM_HEADS,
                                         compute_dtype=jnp.bfloat16))
    out_bf16 = jax.block_until_ready(fwd_bf16(x, params))
    assert out_bf16.shape == (B, S, EMBED_DIM)
    err_bf16 = jnp.max(jnp.abs(out_bf16 - ref))
    assert err_bf16 < 1.5e-1, f"bf16 path max abs err {err_bf16}"

    # 3) Tiled path (n_q > 1): longer sequence exercises the scratch-carry grid.
    S2 = 256
    x2 = jax.random.normal(kx2, (B, S2, INPUT_DIM), jnp.float32)
    ref2 = reference(x2, params, NUM_HEADS)
    out2 = jax.block_until_ready(fwd_f32(x2, params))
    assert out2.shape == (B, S2, EMBED_DIM)
    assert jnp.allclose(out2, ref2, atol=5e-4, rtol=1e-3), \
        f"tiled f32 path max abs err {jnp.max(jnp.abs(out2 - ref2))}"

    print("KERNEL_OK")
</pallas_src>

<mosaic_0001>
module attributes {stable_mosaic.version = 11 : i64} {
  func.func @attention_layer_kernel(%arg0: i32, %arg1: memref<1x8x16xf32, #tpu.memory_space<vmem>>, %arg2: memref<16x32xf32, #tpu.memory_space<vmem>>, %arg3: memref<1x32xf32, #tpu.memory_space<vmem>>, %arg4: memref<32x96xf32, #tpu.memory_space<vmem>>, %arg5: memref<1x96xf32, #tpu.memory_space<vmem>>, %arg6: memref<32x32xf32, #tpu.memory_space<vmem>>, %arg7: memref<1x32xf32, #tpu.memory_space<vmem>>, %arg8: memref<1x32xf32, #tpu.memory_space<vmem>>, %arg9: memref<1x32xf32, #tpu.memory_space<vmem>>, %arg10: memref<1x8x32xf32, #tpu.memory_space<vmem>>) attributes {dimension_semantics = [#tpu.dimension_semantics<parallel>], iteration_bounds = array<i64: 2>, scalar_prefetch = 0 : i64, scratch_operands = 0 : i64, tpu.core_type = #tpu.core_type<tc>, window_params = [{transform_indices = @transform_0, window_bounds = array<i64: 1, 8, 16>}, {pipeline_mode = #tpu.pipeline_mode<synchronous>, transform_indices = @transform_1, window_bounds = array<i64: 16, 32>}, {pipeline_mode = #tpu.pipeline_mode<synchronous>, transform_indices = @transform_2, window_bounds = array<i64: 1, 32>}, {pipeline_mode = #tpu.pipeline_mode<synchronous>, transform_indices = @transform_3, window_bounds = array<i64: 32, 96>}, {pipeline_mode = #tpu.pipeline_mode<synchronous>, transform_indices = @transform_4, window_bounds = array<i64: 1, 96>}, {pipeline_mode = #tpu.pipeline_mode<synchronous>, transform_indices = @transform_5, window_bounds = array<i64: 32, 32>}, {pipeline_mode = #tpu.pipeline_mode<synchronous>, transform_indices = @transform_6, window_bounds = array<i64: 1, 32>}, {pipeline_mode = #tpu.pipeline_mode<synchronous>, transform_indices = @transform_7, window_bounds = array<i64: 1, 32>}, {pipeline_mode = #tpu.pipeline_mode<synchronous>, transform_indices = @transform_8, window_bounds = array<i64: 1, 32>}, {transform_indices = @transform_9, window_bounds = array<i64: 1, 8, 32>}]} {
    %c0 = arith.constant 0 : index
    %c0_0 = arith.constant 0 : index
    %c0_1 = arith.constant 0 : index
    %0 = vector.load %arg1[%c0, %c0_0, %c0_1] : memref<1x8x16xf32, #tpu.memory_space<vmem>>, vector<1x8x16xf32>
    %1 = vector.shape_cast %0 : vector<1x8x16xf32> to vector<8x16xf32>
    %c0_2 = arith.constant 0 : index
    %c0_3 = arith.constant 0 : index
    %2 = vector.load %arg2[%c0_2, %c0_3] : memref<16x32xf32, #tpu.memory_space<vmem>>, vector<16x32xf32>
    %cst = arith.constant dense<0.000000e+00> : vector<8x32xf32>
    %3 = tpu.matmul %1, %2, %cst {dimension_numbers = #tpu.dot_dimension_numbers<[1], [0], [0], [1], [0, 0, 1, 1], [], []>} : vector<8x16xf32>, vector<16x32xf32>, vector<8x32xf32> -> vector<8x32xf32>
    %c0_4 = arith.constant 0 : index
    %c0_5 = arith.constant 0 : index
    %4 = vector.load %arg3[%c0_4, %c0_5] : memref<1x32xf32, #tpu.memory_space<vmem>>, vector<1x32xf32>
    %5 = vector.broadcast %4 : vector<1x32xf32> to vector<8x32xf32>
    %6 = arith.addf %3, %5 : vector<8x32xf32>
    %c0_6 = arith.constant 0 : index
    %c0_7 = arith.constant 0 : index
    %7 = vector.load %arg4[%c0_6, %c0_7] : memref<32x96xf32, #tpu.memory_space<vmem>>, vector<32x96xf32>
    %cst_8 = arith.constant dense<0.000000e+00> : vector<8x96xf32>
    %8 = tpu.matmul %6, %7, %cst_8 {dimension_numbers = #tpu.dot_dimension_numbers<[1], [0], [0], [1], [0, 0, 1, 1], [], []>} : vector<8x32xf32>, vector<32x96xf32>, vector<8x96xf32> -> vector<8x96xf32>
    %c0_9 = arith.constant 0 : index
    %c0_10 = arith.constant 0 : index
    %9 = vector.load %arg5[%c0_9, %c0_10] : memref<1x96xf32, #tpu.memory_space<vmem>>, vector<1x96xf32>
    %10 = vector.broadcast %9 : vector<1x96xf32> to vector<8x96xf32>
    %11 = arith.addf %8, %10 : vector<8x96xf32>
    %12 = vector.extract_strided_slice %11 {offsets = [0, 0], sizes = [8, 32], strides = [1, 1]} : vector<8x96xf32> to vector<8x32xf32>
    %13 = vector.extract_strided_slice %11 {offsets = [0, 32], sizes = [8, 32], strides = [1, 1]} : vector<8x96xf32> to vector<8x32xf32>
    %14 = vector.extract_strided_slice %11 {offsets = [0, 64], sizes = [8, 32], strides = [1, 1]} : vector<8x96xf32> to vector<8x32xf32>
    %c0_11 = arith.constant 0 : index
    %c0_12 = arith.constant 0 : index
    %15 = vector.load %arg6[%c0_11, %c0_12] : memref<32x32xf32, #tpu.memory_space<vmem>>, vector<32x32xf32>
    %c0_13 = arith.constant 0 : index
    %c0_14 = arith.constant 0 : index
    %16 = vector.load %arg7[%c0_13, %c0_14] : memref<1x32xf32, #tpu.memory_space<vmem>>, vector<1x32xf32>
    %c0_15 = arith.constant 0 : index
    %c0_16 = arith.constant 0 : index
    %17 = vector.load %arg8[%c0_15, %c0_16] : memref<1x32xf32, #tpu.memory_space<vmem>>, vector<1x32xf32>
    %c0_17 = arith.constant 0 : index
    %c0_18 = arith.constant 0 : index
    %18 = vector.load %arg9[%c0_17, %c0_18] : memref<1x32xf32, #tpu.memory_space<vmem>>, vector<1x32xf32>
    %19 = vector.extract_strided_slice %12 {offsets = [0, 0], sizes = [8, 8], strides = [1, 1]} : vector<8x32xf32> to vector<8x8xf32>
    %20 = vector.extract_strided_slice %13 {offsets = [0, 0], sizes = [8, 8], strides = [1, 1]} : vector<8x32xf32> to vector<8x8xf32>
    %21 = vector.extract_strided_slice %14 {offsets = [0, 0], sizes = [8, 8], strides = [1, 1]} : vector<8x32xf32> to vector<8x8xf32>
    %cst_19 = arith.constant dense<0.000000e+00> : vector<8x8xf32>
    %22 = tpu.matmul %19, %20, %cst_19 {dimension_numbers = #tpu.dot_dimension_numbers<[1], [1], [0], [0], [0, 0, 1, 0], [], []>} : vector<8x8xf32>, vector<8x8xf32>, vector<8x8xf32> -> vector<8x8xf32>
    %cst_20 = arith.constant 0.353553385 : f32
    %23 = vector.broadcast %cst_20 : f32 to vector<8x8xf32>
    %24 = arith.mulf %22, %23 : vector<8x8xf32>
    %cst_21 = arith.constant dense<0xFF800000> : vector<8xf32>
    %25 = vector.multi_reduction <maximumf>, %24, %cst_21 [1] : vector<8x8xf32> to vector<8xf32>
    %26 = vector.shape_cast %25 : vector<8xf32> to vector<8x1xf32>
    %27 = vector.broadcast %26 : vector<8x1xf32> to vector<8x8xf32>
    %28 = arith.subf %24, %27 : vector<8x8xf32>
    %29 = math.exp %28 : vector<8x8xf32>
    %cst_22 = arith.constant dense<0.000000e+00> : vector<8xf32>
    %30 = vector.multi_reduction <add>, %29, %cst_22 [1] : vector<8x8xf32> to vector<8xf32>
    %31 = vector.shape_cast %30 : vector<8xf32> to vector<8x1xf32>
    %32 = vector.broadcast %31 : vector<8x1xf32> to vector<8x8xf32>
    %33 = arith.divf %29, %32 : vector<8x8xf32>
    %cst_23 = arith.constant dense<0.000000e+00> : vector<8x8xf32>
    %34 = tpu.matmul %33, %21, %cst_23 {dimension_numbers = #tpu.dot_dimension_numbers<[1], [0], [0], [1], [0, 0, 1, 1], [], []>} : vector<8x8xf32>, vector<8x8xf32>, vector<8x8xf32> -> vector<8x8xf32>
    %35 = vector.extract_strided_slice %12 {offsets = [0, 8], sizes = [8, 8], strides = [1, 1]} : vector<8x32xf32> to vector<8x8xf32>
    %36 = vector.extract_strided_slice %13 {offsets = [0, 8], sizes = [8, 8], strides = [1, 1]} : vector<8x32xf32> to vector<8x8xf32>
    %37 = vector.extract_strided_slice %14 {offsets = [0, 8], sizes = [8, 8], strides = [1, 1]} : vector<8x32xf32> to vector<8x8xf32>
    %cst_24 = arith.constant dense<0.000000e+00> : vector<8x8xf32>
    %38 = tpu.matmul %35, %36, %cst_24 {dimension_numbers = #tpu.dot_dimension_numbers<[1], [1], [0], [0], [0, 0, 1, 0], [], []>} : vector<8x8xf32>, vector<8x8xf32>, vector<8x8xf32> -> vector<8x8xf32>
    %cst_25 = arith.constant 0.353553385 : f32
    %39 = vector.broadcast %cst_25 : f32 to vector<8x8xf32>
    %40 = arith.mulf %38, %39 : vector<8x8xf32>
    %cst_26 = arith.constant dense<0xFF800000> : vector<8xf32>
    %41 = vector.multi_reduction <maximumf>, %40, %cst_26 [1] : vector<8x8xf32> to vector<8xf32>
    %42 = vector.shape_cast %41 : vector<8xf32> to vector<8x1xf32>
    %43 = vector.broadcast %42 : vector<8x1xf32> to vector<8x8xf32>
    %44 = arith.subf %40, %43 : vector<8x8xf32>
    %45 = math.exp %44 : vector<8x8xf32>
    %cst_27 = arith.constant dense<0.000000e+00> : vector<8xf32>
    %46 = vector.multi_reduction <add>, %45, %cst_27 [1] : vector<8x8xf32> to vector<8xf32>
    %47 = vector.shape_cast %46 : vector<8xf32> to vector<8x1xf32>
    %48 = vector.broadcast %47 : vector<8x1xf32> to vector<8x8xf32>
    %49 = arith.divf %45, %48 : vector<8x8xf32>
    %cst_28 = arith.constant dense<0.000000e+00> : vector<8x8xf32>
    %50 = tpu.matmul %49, %37, %cst_28 {dimension_numbers = #tpu.dot_dimension_numbers<[1], [0], [0], [1], [0, 0, 1, 1], [], []>} : vector<8x8xf32>, vector<8x8xf32>, vector<8x8xf32> -> vector<8x8xf32>
    %51 = vector.extract_strided_slice %12 {offsets = [0, 16], sizes = [8, 8], strides = [1, 1]} : vector<8x32xf32> to vector<8x8xf32>
    %52 = vector.extract_strided_slice %13 {offsets = [0, 16], sizes = [8, 8], strides = [1, 1]} : vector<8x32xf32> to vector<8x8xf32>
    %53 = vector.extract_strided_slice %14 {offsets = [0, 16], sizes = [8, 8], strides = [1, 1]} : vector<8x32xf32> to vector<8x8xf32>
    %cst_29 = arith.constant dense<0.000000e+00> : vector<8x8xf32>
    %54 = tpu.matmul %51, %52, %cst_29 {dimension_numbers = #tpu.dot_dimension_numbers<[1], [1], [0], [0], [0, 0, 1, 0], [], []>} : vector<8x8xf32>, vector<8x8xf32>, vector<8x8xf32> -> vector<8x8xf32>
    %cst_30 = arith.constant 0.353553385 : f32
    %55 = vector.broadcast %cst_30 : f32 to vector<8x8xf32>
    %56 = arith.mulf %54, %55 : vector<8x8xf32>
    %cst_31 = arith.constant dense<0xFF800000> : vector<8xf32>
    %57 = vector.multi_reduction <maximumf>, %56, %cst_31 [1] : vector<8x8xf32> to vector<8xf32>
    %58 = vector.shape_cast %57 : vector<8xf32> to vector<8x1xf32>
    %59 = vector.broadcast %58 : vector<8x1xf32> to vector<8x8xf32>
    %60 = arith.subf %56, %59 : vector<8x8xf32>
    %61 = math.exp %60 : vector<8x8xf32>
    %cst_32 = arith.constant dense<0.000000e+00> : vector<8xf32>
    %62 = vector.multi_reduction <add>, %61, %cst_32 [1] : vector<8x8xf32> to vector<8xf32>
    %63 = vector.shape_cast %62 : vector<8xf32> to vector<8x1xf32>
    %64 = vector.broadcast %63 : vector<8x1xf32> to vector<8x8xf32>
    %65 = arith.divf %61, %64 : vector<8x8xf32>
    %cst_33 = arith.constant dense<0.000000e+00> : vector<8x8xf32>
    %66 = tpu.matmul %65, %53, %cst_33 {dimension_numbers = #tpu.dot_dimension_numbers<[1], [0], [0], [1], [0, 0, 1, 1], [], []>} : vector<8x8xf32>, vector<8x8xf32>, vector<8x8xf32> -> vector<8x8xf32>
    %67 = vector.extract_strided_slice %12 {offsets = [0, 24], sizes = [8, 8], strides = [1, 1]} : vector<8x32xf32> to vector<8x8xf32>
    %68 = vector.extract_strided_slice %13 {offsets = [0, 24], sizes = [8, 8], strides = [1, 1]} : vector<8x32xf32> to vector<8x8xf32>
    %69 = vector.extract_strided_slice %14 {offsets = [0, 24], sizes = [8, 8], strides = [1, 1]} : vector<8x32xf32> to vector<8x8xf32>
    %cst_34 = arith.constant dense<0.000000e+00> : vector<8x8xf32>
    %70 = tpu.matmul %67, %68, %cst_34 {dimension_numbers = #tpu.dot_dimension_numbers<[1], [1], [0], [0], [0, 0, 1, 0], [], []>} : vector<8x8xf32>, vector<8x8xf32>, vector<8x8xf32> -> vector<8x8xf32>
    %cst_35 = arith.constant 0.353553385 : f32
    %71 = vector.broadcast %cst_35 : f32 to vector<8x8xf32>
    %72 = arith.mulf %70, %71 : vector<8x8xf32>
    %cst_36 = arith.constant dense<0xFF800000> : vector<8xf32>
    %73 = vector.multi_reduction <maximumf>, %72, %cst_36 [1] : vector<8x8xf32> to vector<8xf32>
    %74 = vector.shape_cast %73 : vector<8xf32> to vector<8x1xf32>
    %75 = vector.broadcast %74 : vector<8x1xf32> to vector<8x8xf32>
    %76 = arith.subf %72, %75 : vector<8x8xf32>
    %77 = math.exp %76 : vector<8x8xf32>
    %cst_37 = arith.constant dense<0.000000e+00> : vector<8xf32>
    %78 = vector.multi_reduction <add>, %77, %cst_37 [1] : vector<8x8xf32> to vector<8xf32>
    %79 = vector.shape_cast %78 : vector<8xf32> to vector<8x1xf32>
    %80 = vector.broadcast %79 : vector<8x1xf32> to vector<8x8xf32>
    %81 = arith.divf %77, %80 : vector<8x8xf32>
    %cst_38 = arith.constant dense<0.000000e+00> : vector<8x8xf32>
    %82 = tpu.matmul %81, %69, %cst_38 {dimension_numbers = #tpu.dot_dimension_numbers<[1], [0], [0], [1], [0, 0, 1, 1], [], []>} : vector<8x8xf32>, vector<8x8xf32>, vector<8x8xf32> -> vector<8x8xf32>
    %83 = tpu.concatenate %34, %50, %66, %82 in 1 : vector<8x8xf32>, vector<8x8xf32>, vector<8x8xf32>, vector<8x8xf32> -> vector<8x32xf32>
    %cst_39 = arith.constant dense<0.000000e+00> : vector<8x32xf32>
    %84 = tpu.matmul %83, %15, %cst_39 {dimension_numbers = #tpu.dot_dimension_numbers<[1], [0], [0], [1], [0, 0, 1, 1], [], []>} : vector<8x32xf32>, vector<32x32xf32>, vector<8x32xf32> -> vector<8x32xf32>
    %85 = vector.broadcast %16 : vector<1x32xf32> to vector<8x32xf32>
    %86 = arith.addf %84, %85 : vector<8x32xf32>
    %87 = arith.addf %86, %6 : vector<8x32xf32>
    %cst_40 = arith.constant dense<0.000000e+00> : vector<8xf32>
    %88 = vector.multi_reduction <add>, %87, %cst_40 [1] : vector<8x32xf32> to vector<8xf32>
    %89 = vector.shape_cast %88 : vector<8xf32> to vector<8x1xf32>
    %cst_41 = arith.constant 3.200000e+01 : f32
    %90 = vector.broadcast %cst_41 : f32 to vector<8x1xf32>
    %91 = arith.divf %89, %90 : vector<8x1xf32>
    %92 = vector.broadcast %91 : vector<8x1xf32> to vector<8x32xf32>
    %93 = arith.subf %87, %92 : vector<8x32xf32>
    %94 = arith.mulf %93, %93 : vector<8x32xf32>
    %cst_42 = arith.constant dense<0.000000e+00> : vector<8xf32>
    %95 = vector.multi_reduction <add>, %94, %cst_42 [1] : vector<8x32xf32> to vector<8xf32>
    %96 = vector.shape_cast %95 : vector<8xf32> to vector<8x1xf32>
    %cst_43 = arith.constant 3.200000e+01 : f32
    %97 = vector.broadcast %cst_43 : f32 to vector<8x1xf32>
    %98 = arith.divf %96, %97 : vector<8x1xf32>
    %99 = vector.broadcast %91 : vector<8x1xf32> to vector<8x32xf32>
    %100 = arith.subf %87, %99 : vector<8x32xf32>
    %cst_44 = arith.constant 9.99999974E-6 : f32
    %101 = vector.broadcast %cst_44 : f32 to vector<8x1xf32>
    %102 = arith.addf %98, %101 : vector<8x1xf32>
    %103 = math.rsqrt %102 : vector<8x1xf32>
    %104 = vector.broadcast %103 : vector<8x1xf32> to vector<8x32xf32>
    %105 = arith.mulf %100, %104 : vector<8x32xf32>
    %106 = vector.broadcast %17 : vector<1x32xf32> to vector<8x32xf32>
    %107 = arith.mulf %105, %106 : vector<8x32xf32>
    %108 = vector.broadcast %18 : vector<1x32xf32> to vector<8x32xf32>
    %109 = arith.addf %107, %108 : vector<8x32xf32>
    %c0_45 = arith.constant 0 : index
    %c0_46 = arith.constant 0 : index
    %c0_47 = arith.constant 0 : index
    %110 = vector.load %arg10[%c0_45, %c0_46, %c0_47] : memref<1x8x32xf32, #tpu.memory_space<vmem>>, vector<1x8x32xf32>
    %111 = vector.shape_cast %110 : vector<1x8x32xf32> to vector<8x32xf32>
    %112 = vector.shape_cast %109 : vector<8x32xf32> to vector<1x8x32xf32>
    tpu.vector_store %arg10[%c0_45, %c0_46, %c0_47], %112 {strides = array<i32>} : memref<1x8x32xf32, #tpu.memory_space<vmem>>, vector<1x8x32xf32>,
    return
  }
  func.func @transform_0(%arg0: i32) -> (i32, i32, i32) {
    %c0_i32 = arith.constant 0 : i32
    %c0_i32_0 = arith.constant 0 : i32
    %c0_i32_1 = arith.constant 0 : i32
    return %arg0, %c0_i32, %c0_i32_0 : i32, i32, i32
  }
  func.func @transform_1(%arg0: i32) -> (i32, i32) {
    %c0_i32 = arith.constant 0 : i32
    %c0_i32_0 = arith.constant 0 : i32
    %c0_i32_1 = arith.constant 0 : i32
    return %c0_i32, %c0_i32_0 : i32, i32
  }
  func.func @transform_2(%arg0: i32) -> (i32, i32) {
    %c0_i32 = arith.constant 0 : i32
    %c0_i32_0 = arith.constant 0 : i32
    %c0_i32_1 = arith.constant 0 : i32
    return %c0_i32, %c0_i32_0 : i32, i32
  }
  func.func @transform_3(%arg0: i32) -> (i32, i32) {
    %c0_i32 = arith.constant 0 : i32
    %c0_i32_0 = arith.constant 0 : i32
    %c0_i32_1 = arith.constant 0 : i32
    return %c0_i32, %c0_i32_0 : i32, i32
  }
  func.func @transform_4(%arg0: i32) -> (i32, i32) {
    %c0_i32 = arith.constant 0 : i32
    %c0_i32_0 = arith.constant 0 : i32
    %c0_i32_1 = arith.constant 0 : i32
    return %c0_i32, %c0_i32_0 : i32, i32
  }
  func.func @transform_5(%arg0: i32) -> (i32, i32) {
    %c0_i32 = arith.constant 0 : i32
    %c0_i32_0 = arith.constant 0 : i32
    %c0_i32_1 = arith.constant 0 : i32
    return %c0_i32, %c0_i32_0 : i32, i32
  }
  func.func @transform_6(%arg0: i32) -> (i32, i32) {
    %c0_i32 = arith.constant 0 : i32
    %c0_i32_0 = arith.constant 0 : i32
    %c0_i32_1 = arith.constant 0 : i32
    return %c0_i32, %c0_i32_0 : i32, i32
  }
  func.func @transform_7(%arg0: i32) -> (i32, i32) {
    %c0_i32 = arith.constant 0 : i32
    %c0_i32_0 = arith.constant 0 : i32
    %c0_i32_1 = arith.constant 0 : i32
    return %c0_i32, %c0_i32_0 : i32, i32
  }
  func.func @transform_8(%arg0: i32) -> (i32, i32) {
    %c0_i32 = arith.constant 0 : i32
    %c0_i32_0 = arith.constant 0 : i32
    %c0_i32_1 = arith.constant 0 : i32
    return %c0_i32, %c0_i32_0 : i32, i32
  }
  func.func @transform_9(%arg0: i32) -> (i32, i32, i32) {
    %c0_i32 = arith.constant 0 : i32
    %c0_i32_0 = arith.constant 0 : i32
    %c0_i32_1 = arith.constant 0 : i32
    return %arg0, %c0_i32, %c0_i32_0 : i32, i32, i32
  }
}

</mosaic_0001>

<llo_original>
// kernel: attention_layer.1
$region0: #{attention_layer.1}
  #allocation0 [shape = 'u32[]', space=smem, size = 0x4, offset = 0x4, fixed_abs, tag = 'smem constant byte address 0x4 - core index']
  #allocation1 [shape = 'u32[144,128]{1,0:T(1,128)}', space=vmem, size = 0x12000, scoped, tag = 'internal scratch']
  %s0 = inlined_call_operand.vmem [shape: f32[2,8,16], index: 0, kind: input, shape index: {}]
  %s1 = inlined_call_operand.vmem [shape: f32[16,32], index: 1, kind: input, shape index: {}]
  %s2 = inlined_call_operand.vmem [shape: f32[1,32], index: 2, kind: input, shape index: {}]
  %s3 = inlined_call_operand.vmem [shape: f32[32,96], index: 3, kind: input, shape index: {}]
  %s4 = inlined_call_operand.vmem [shape: f32[1,96], index: 4, kind: input, shape index: {}]
  %s5 = inlined_call_operand.vmem [shape: f32[32,32], index: 5, kind: input, shape index: {}]
  %s6 = inlined_call_operand.vmem [shape: f32[1,32], index: 6, kind: input, shape index: {}]
  %s7 = inlined_call_operand.vmem [shape: f32[1,32], index: 7, kind: input, shape index: {}]
  %s8 = inlined_call_operand.vmem [shape: f32[1,32], index: 8, kind: input, shape index: {}]
  %s9 = inlined_call_operand.hbm [shape: f32[2,8,32], index: 9, kind: output, shape index: {}]
  %s10 = sld [smem:[#allocation0]]
  $region69: #{attention_layer.1} parent=0
    _
  %s12 = ssub.s32 1, %s10
  %s13 = scalar_select 0, %s12, %s10
  $region1: #{attention_layer.1} parent=0
    #allocation2 [shape = 'u8[8192]{0}', space=vmem, size = 0x2000, scoped, tag = 'output window, operand 0']
    #allocation3 [shape = 's32[2]{0}', space=sflag, size = 0x8, scoped, tag = 'scoped memory for attention_layer.1']
    %14 = vsyncpa [#allocation3], 0
    %s15 = scalar_lea.sflag [#allocation3], 1
    %16 = vsyncpa %s15, 0
    loop: start=0, step=1, limit=4
    $region2: #{attention_layer.1} parent=1 // loop_pre_header
      _
    $region3: #{attention_layer.1} parent=1 // loop_header
      %s18 = sphi 0, %s22
      %p19 = scmp.ge.s32.totalorder %s18, 4
      %s28 = sphi 0, %s30
      %s31 = sphi 0, %s28
      %s32 = sphi 0, %s31
      %s48 = sphi 0, %s32
      %s52 = sphi 0, %s52
      %s54 = sphi 0, %s52
      %s55 = sphi 0, %s54
      %s69 = sphi 0, %s55
      %s73 = sphi 0, %s73
      %s75 = sphi 0, %s73
      %s76 = sphi 0, %s75
      %s90 = sphi 0, %s76
      %s94 = sphi 0, %s94
      %s96 = sphi 0, %s94
      %s97 = sphi 0, %s96
      %s111 = sphi 0, %s97
      %s115 = sphi 0, %s115
      %s117 = sphi 0, %s115
      %s118 = sphi 0, %s117
      %s132 = sphi 0, %s118
      %s136 = sphi 0, %s136
      %s138 = sphi 0, %s136
      %s139 = sphi 0, %s138
      %s153 = sphi 0, %s139
      %s157 = sphi 0, %s157
      %s159 = sphi 0, %s157
      %s160 = sphi 0, %s159
      %s174 = sphi 0, %s160
      %s178 = sphi 0, %s178
      %s180 = sphi 0, %s178
      %s181 = sphi 0, %s180
      %s195 = sphi 0, %s181
      %s199 = sphi 0, %s199
      %s201 = sphi 0, %s199
      %s202 = sphi 0, %s201
      %s216 = sphi 0, %s202
      %s222 = sphi 0, %s224
      %s225 = sphi 0, %s222
      %s226 = sphi 0, %s225
      %s242 = sphi 0, %s226
    $region4: #{attention_layer.1} parent=1 // loop_header_branch
      %21 = sbr.rel (%p19) target = $region8
    $region5: #{attention_layer.1} parent=1 // loop_body
      %s23 = ssub.s32 %s18, 1
      %s24 = ssub.s32 %s18, 2
      %s25 = sadd.s32 %s18, 1
      %s26 = ssub.s32 %s18, %s25
      %p27 = scmp.eq.s32.totalorder %s26, 0
      %s29 = sadd.s32 %s28, 1
      %s30 = scalar_select %p27, %s28, %s29
      %p33 = pneg %p27
      %p34 = scmp.eq.s32.totalorder %s18, 1
      %p35 = por %p33, %p34
      %p36 = scmp.ne.s32.totalorder %s28, %s31
      %p37 = scmp.eq.s32.totalorder %s18, 0
      %p38 = por %p36, %p37
      %p39 = scmp.ne.s32.totalorder %s28, %s31
      %p40 = scmp.eq.s32.totalorder %s23, 1
      %p41 = por %p39, %p40
      %p42 = scmp.ne.s32.totalorder %s31, %s32
      %p43 = scmp.eq.s32.totalorder %s23, 0
      %p44 = por %p42, %p43
      %p45 = scmp.ne.s32.totalorder %s31, %s32
      %p46 = scmp.eq.s32.totalorder %s24, 1
      %p47 = por %p45, %p46
      %p49 = scmp.ne.s32.totalorder %s32, %s48
      %p50 = scmp.eq.s32.totalorder %s24, 0
      %p51 = por %p49, %p50
      %s53 = sadd.s32 %s52, 1
      %p56 = scmp.eq.s32.totalorder %s18, 1
      %p57 = scmp.ne.s32.totalorder %s52, %s54
      %p58 = scmp.eq.s32.totalorder %s18, 0
      %p59 = por %p57, %p58
      %p60 = scmp.ne.s32.totalorder %s52, %s54
      %p61 = scmp.eq.s32.totalorder %s23, 1
      %p62 = por %p60, %p61
      %p63 = scmp.ne.s32.totalorder %s54, %s55
      %p64 = scmp.eq.s32.totalorder %s23, 0
      %p65 = por %p63, %p64
      %p66 = scmp.ne.s32.totalorder %s54, %s55
      %p67 = scmp.eq.s32.totalorder %s24, 1
      %p68 = por %p66, %p67
      %p70 = scmp.ne.s32.totalorder %s55, %s69
      %p71 = scmp.eq.s32.totalorder %s24, 0
      %p72 = por %p70, %p71
      %s74 = sadd.s32 %s73, 1
      %p77 = scmp.eq.s32.totalorder %s18, 1
      %p78 = scmp.ne.s32.totalorder %s73, %s75
      %p79 = scmp.eq.s32.totalorder %s18, 0
      %p80 = por %p78, %p79
      %p81 = scmp.ne.s32.totalorder %s73, %s75
      %p82 = scmp.eq.s32.totalorder %s23, 1
      %p83 = por %p81, %p82
      %p84 = scmp.ne.s32.totalorder %s75, %s76
      %p85 = scmp.eq.s32.totalorder %s23, 0
      %p86 = por %p84, %p85
      %p87 = scmp.ne.s32.totalorder %s75, %s76
      %p88 = scmp.eq.s32.totalorder %s24, 1
      %p89 = por %p87, %p88
      %p91 = scmp.ne.s32.totalorder %s76, %s90
      %p92 = scmp.eq.s32.totalorder %s24, 0
      %p93 = por %p91, %p92
      %s95 = sadd.s32 %s94, 1
      %p98 = scmp.eq.s32.totalorder %s18, 1
      %p99 = scmp.ne.s32.totalorder %s94, %s96
      %p100 = scmp.eq.s32.totalorder %s18, 0
      %p101 = por %p99, %p100
      %p102 = scmp.ne.s32.totalorder %s94, %s96
      %p103 = scmp.eq.s32.totalorder %s23, 1
      %p104 = por %p102, %p103
      %p105 = scmp.ne.s32.totalorder %s96, %s97
      %p106 = scmp.eq.s32.totalorder %s23, 0
      %p107 = por %p105, %p106
      %p108 = scmp.ne.s32.totalorder %s96, %s97
      %p109 = scmp.eq.s32.totalorder %s24, 1
      %p110 = por %p108, %p109
      %p112 = scmp.ne.s32.totalorder %s97, %s111
      %p113 = scmp.eq.s32.totalorder %s24, 0
      %p114 = por %p112, %p113
      %s116 = sadd.s32 %s115, 1
      %p119 = scmp.eq.s32.totalorder %s18, 1
      %p120 = scmp.ne.s32.totalorder %s115, %s117
      %p121 = scmp.eq.s32.totalorder %s18, 0
      %p122 = por %p120, %p121
      %p123 = scmp.ne.s32.totalorder %s115, %s117
      %p124 = scmp.eq.s32.totalorder %s23, 1
      %p125 = por %p123, %p124
      %p126 = scmp.ne.s32.totalorder %s117, %s118
      %p127 = scmp.eq.s32.totalorder %s23, 0
      %p128 = por %p126, %p127
      %p129 = scmp.ne.s32.totalorder %s117, %s118
      %p130 = scmp.eq.s32.totalorder %s24, 1
      %p131 = por %p129, %p130
      %p133 = scmp.ne.s32.totalorder %s118, %s132
      %p134 = scmp.eq.s32.totalorder %s24, 0
      %p135 = por %p133, %p134
      %s137 = sadd.s32 %s136, 1
      %p140 = scmp.eq.s32.totalorder %s18, 1
      %p141 = scmp.ne.s32.totalorder %s136, %s138
      %p142 = scmp.eq.s32.totalorder %s18, 0
      %p143 = por %p141, %p142
      %p144 = scmp.ne.s32.totalorder %s136, %s138
      %p145 = scmp.eq.s32.totalorder %s23, 1
      %p146 = por %p144, %p145
      %p147 = scmp.ne.s32.totalorder %s138, %s139
      %p148 = scmp.eq.s32.totalorder %s23, 0
      %p149 = por %p147, %p148
      %p150 = scmp.ne.s32.totalorder %s138, %s139
      %p151 = scmp.eq.s32.totalorder %s24, 1
      %p152 = por %p150, %p151
      %p154 = scmp.ne.s32.totalorder %s139, %s153
      %p155 = scmp.eq.s32.totalorder %s24, 0
      %p156 = por %p154, %p155
      %s158 = sadd.s32 %s157, 1
      %p161 = scmp.eq.s32.totalorder %s18, 1
      %p162 = scmp.ne.s32.totalorder %s157, %s159
      %p163 = scmp.eq.s32.totalorder %s18, 0
      %p164 = por %p162, %p163
      %p165 = scmp.ne.s32.totalorder %s157, %s159
      %p166 = scmp.eq.s32.totalorder %s23, 1
      %p167 = por %p165, %p166
      %p168 = scmp.ne.s32.totalorder %s159, %s160
      %p169 = scmp.eq.s32.totalorder %s23, 0
      %p170 = por %p168, %p169
      %p171 = scmp.ne.s32.totalorder %s159, %s160
      %p172 = scmp.eq.s32.totalorder %s24, 1
      %p173 = por %p171, %p172
      %p175 = scmp.ne.s32.totalorder %s160, %s174
      %p176 = scmp.eq.s32.totalorder %s24, 0
      %p177 = por %p175, %p176
      %s179 = sadd.s32 %s178, 1
      %p182 = scmp.eq.s32.totalorder %s18, 1
      %p183 = scmp.ne.s32.totalorder %s178, %s180
      %p184 = scmp.eq.s32.totalorder %s18, 0
      %p185 = por %p183, %p184
      %p186 = scmp.ne.s32.totalorder %s178, %s180
      %p187 = scmp.eq.s32.totalorder %s23, 1
      %p188 = por %p186, %p187
      %p189 = scmp.ne.s32.totalorder %s180, %s181
      %p190 = scmp.eq.s32.totalorder %s23, 0
      %p191 = por %p189, %p190
      %p192 = scmp.ne.s32.totalorder %s180, %s181
      %p193 = scmp.eq.s32.totalorder %s24, 1
      %p194 = por %p192, %p193
      %p196 = scmp.ne.s32.totalorder %s181, %s195
      %p197 = scmp.eq.s32.totalorder %s24, 0
      %p198 = por %p196, %p197
      %s200 = sadd.s32 %s199, 1
      %p203 = scmp.eq.s32.totalorder %s18, 1
      %p204 = scmp.ne.s32.totalorder %s199, %s201
      %p205 = scmp.eq.s32.totalorder %s18, 0
      %p206 = por %p204, %p205
      %p207 = scmp.ne.s32.totalorder %s199, %s201
      %p208 = scmp.eq.s32.totalorder %s23, 1
      %p209 = por %p207, %p208
      %p210 = scmp.ne.s32.totalorder %s201, %s202
      %p211 = scmp.eq.s32.totalorder %s23, 0
      %p212 = por %p210, %p211
      %p213 = scmp.ne.s32.totalorder %s201, %s202
      %p214 = scmp.eq.s32.totalorder %s24, 1
      %p215 = por %p213, %p214
      %p217 = scmp.ne.s32.totalorder %s202, %s216
      %p218 = scmp.eq.s32.totalorder %s24, 0
      %p219 = por %p217, %p218
      %s220 = ssub.s32 %s18, %s25
      %p221 = scmp.eq.s32.totalorder %s220, 0
      %s223 = sadd.s32 %s222, 1
      %s224 = scalar_select %p221, %s222, %s223
      %p227 = pneg %p221
      %p228 = scmp.eq.s32.totalorder %s18, 1
      %p229 = por %p227, %p228
      %p230 = scmp.ne.s32.totalorder %s222, %s225
      %p231 = scmp.eq.s32.totalorder %s18, 0
      %p232 = por %p230, %p231
      %p233 = scmp.ne.s32.totalorder %s222, %s225
      %p234 = scmp.eq.s32.totalorder %s23, 1
      %p235 = por %p233, %p234
      %p236 = scmp.ne.s32.totalorder %s225, %s226
      %p237 = scmp.eq.s32.totalorder %s23, 0
      %p238 = por %p236, %p237
      %p239 = scmp.ne.s32.totalorder %s225, %s226
      %p240 = scmp.eq.s32.totalorder %s24, 1
      %p241 = por %p239, %p240
      %p243 = scmp.ne.s32.totalorder %s226, %s242
      %p244 = scmp.eq.s32.totalorder %s24, 0
      %p245 = por %p243, %p244
      %p246 = scmp.le.s32.totalorder 1, %s18
      %p247 = scmp.lt.s32.totalorder %s18, 3
      %p248 = pnand %p246, %p247
      %p249 = pneg %p248
      // Predicated region
      $region9: #{attention_layer.1} parent=5 // pred_check
        _
      $region10: #{attention_layer.1} parent=5 // pred_check_branch
        %251 = sbr.rel (%p248) target = $region12
      $region11: #{attention_layer.1} parent=5 // pred_region
        %s252 = ssub.s32 %s18, 1
        // Predicated region
        $region13: #{attention_layer.1} parent=11 // pred_check
          %p253 = pneg %p65
        $region14: #{attention_layer.1} parent=11 // pred_check_branch
          %255 = sbr.rel (%p253) target = $region16
        $region15: #{attention_layer.1} parent=11 // pred_region
          _
        $region16: #{attention_layer.1} parent=11 // pred_fallthru
          _
        // Predicated region
        $region17: #{attention_layer.1} parent=11 // pred_check
          %p256 = pneg %p86
        $region18: #{attention_layer.1} parent=11 // pred_check_branch
          %258 = sbr.rel (%p256) target = $region20
        $region19: #{attention_layer.1} parent=11 // pred_region
          _
        $region20: #{attention_layer.1} parent=11 // pred_fallthru
          _
        // Predicated region
        $region21: #{attention_layer.1} parent=11 // pred_check
          %p259 = pneg %p107
        $region22: #{attention_layer.1} parent=11 // pred_check_branch
          %261 = sbr.rel (%p259) target = $region24
        $region23: #{attention_layer.1} parent=11 // pred_region
          _
        $region24: #{attention_layer.1} parent=11 // pred_fallthru
          _
        // Predicated region
        $region25: #{attention_layer.1} parent=11 // pred_check
          %p262 = pneg %p128
        $region26: #{attention_layer.1} parent=11 // pred_check_branch
          %264 = sbr.rel (%p262) target = $region28
        $region27: #{attention_layer.1} parent=11 // pred_region
          _
        $region28: #{attention_layer.1} parent=11 // pred_fallthru
          _
        // Predicated region
        $region29: #{attention_layer.1} parent=11 // pred_check
          %p265 = pneg %p149
        $region30: #{attention_layer.1} parent=11 // pred_check_branch
          %267 = sbr.rel (%p265) target = $region32
        $region31: #{attention_layer.1} parent=11 // pred_region
          _
        $region32: #{attention_layer.1} parent=11 // pred_fallthru
          _
        // Predicated region
        $region33: #{attention_layer.1} parent=11 // pred_check
          %p268 = pneg %p170
        $region34: #{attention_layer.1} parent=11 // pred_check_branch
          %270 = sbr.rel (%p268) target = $region36
        $region35: #{attention_layer.1} parent=11 // pred_region
          _
        $region36: #{attention_layer.1} parent=11 // pred_fallthru
          _
        // Predicated region
        $region37: #{attention_layer.1} parent=11 // pred_check
          %p271 = pneg %p191
        $region38: #{attention_layer.1} parent=11 // pred_check_branch
          %273 = sbr.rel (%p271) target = $region40
        $region39: #{attention_layer.1} parent=11 // pred_region
          _
        $region40: #{attention_layer.1} parent=11 // pred_fallthru
          _
        // Predicated region
        $region41: #{attention_layer.1} parent=11 // pred_check
          %p274 = pneg %p212
        $region42: #{attention_layer.1} parent=11 // pred_check_branch
          %276 = sbr.rel (%p274) target = $region44
        $region43: #{attention_layer.1} parent=11 // pred_region
          _
        $region44: #{attention_layer.1} parent=11 // pred_fallthru
          _
      $region12: #{attention_layer.1} parent=5 // pred_fallthru
        _
      %p277 = scmp.lt.s32.totalorder %s18, 2
      // Predicated region
      $region45: #{attention_layer.1} parent=5 // pred_check
        %p278 = pneg %p277
      $region46: #{attention_layer.1} parent=5 // pred_check_branch
        %280 = sbr.rel (%p278) target = $region48
      $region47: #{attention_layer.1} parent=5 // pred_region
        // Predicated region
        $region49: #{attention_layer.1} parent=47 // pred_check
          %p281 = pneg %p38
        $region50: #{attention_layer.1} parent=47 // pred_check_branch
          %283 = sbr.rel (%p281) target = $region52
        $region51: #{attention_layer.1} parent=47 // pred_region
          %p284 = scmp.lt.s32.totalorder %s18, 1
          %s285 = scalar_select %p284, %s18, 1
          %s286 = smul.addr %s285, 8
          %s287 = scalar_lea.vmem %s0, %s286
        $region52: #{attention_layer.1} parent=47 // pred_fallthru
          _
      $region48: #{attention_layer.1} parent=5 // pred_fallthru
        _
      %p288 = scmp.le.s32.totalorder 1, %s18
      %p289 = scmp.lt.s32.totalorder %s18, 3
      %p290 = pnand %p288, %p289
      %p291 = pneg %p290
      // Predicated region
      $region53: #{attention_layer.1} parent=5 // pred_check
        _
      $region54: #{attention_layer.1} parent=5 // pred_check_branch
        %293 = sbr.rel (%p290) target = $region56
      $region55: #{attention_layer.1} parent=5 // pred_region
        %s294 = ssub.s32 %s18, 1
        %p295 = scmp.lt.s32.totalorder %s23, 1
        %s296 = scalar_select %p295, %s23, 1
        %s297 = smul.addr %s296, 8
        %s298 = scalar_lea.vmem %s0, %s297
        %p299 = pneg %p44
        %p300 = pneg %p41
        %p301 = pneg %p65
        %p302 = pneg %p62
        %p303 = pneg %p86
        %p304 = pneg %p83
        %p305 = pneg %p107
        %p306 = pneg %p104
        %p307 = pneg %p128
        %p308 = pneg %p125
        %p309 = pneg %p149
        %p310 = pneg %p146
        %p311 = pneg %p170
        %p312 = pneg %p167
        %p313 = pneg %p191
        %p314 = pneg %p188
        %p315 = pneg %p212
        %p316 = pneg %p209
        %p317 = pneg %p238
        %p318 = pneg %p235
        %s319 = sand.u32 %s225, 1
        %s320 = scalar_lea.sflag [#allocation3], %s319
        %s321 = sand.u32 %s225, 1
        %s322 = smul.addr %s321, 8
        %s323 = scalar_lea.vmem [#allocation2], %s322
        %p324 = scmp.lt.s32.totalorder %s23, 1
        %s325 = scalar_select %p324, %s23, 1
        %s326 = smul.addr %s325, 8
        %s327 = scalar_lea.vmem %s0, %s326
        %v328 = vld [vmem:[%s327] sm:$0xff]
        %v329 = vld [vmem:[%s1] sm:$0xff]
        %v330 = vld [vmem:[%s1 + $0x8] sm:$0xff]
        %v331 = vld [vmem:[%s2] sm:$0x1]
        %v333 = vlaneseq
        %v334 = vshrl.u32 %v333, 7
        %v335 = vsub.s32 0, %v334
        %v336 = vrot.slane %v331, %v335
        %vm338 = vcmask 130048
        %v340 = vsel %vm338, %v328, 0
        %342 = vmatprep.subr.mxu0 0.0
        %343 = vmatpush1.msra.mxu0 %v329
        %344 = vmatprep.subr.mxu0 0.0
        %345 = vmatpush1.msra.mxu0 %v330
        %346 = vmatprep.subr.mxu0 0.0
        %347 = vmatpush1.msra.mxu0 0.0
        %348 = vmatprep.subr.mxu0 0.0
        %349 = vmatpush1.msra.mxu0 0.0
        %350 = vmatprep.subr.mxu0 0.0
        %351 = vmatpush1.msra.mxu0 0.0
        %352 = vmatprep.subr.mxu0 0.0
        %353 = vmatpush1.msra.mxu0 0.0
        %354 = vmatprep.subr.mxu0 0.0
        %355 = vmatpush1.msra.mxu0 0.0
        %356 = vmatprep.subr.mxu0 0.0
        %357 = vmatpush1.msra.mxu0 0.0
        %358 = vmatprep.subr.mxu0 0.0
        %359 = vmatpush1.msra.mxu0 0.0
        %360 = vmatprep.subr.mxu0 0.0
        %361 = vmatpush1.msra.mxu0 0.0
        %362 = vmatprep.subr.mxu0 0.0
        %363 = vmatpush1.msra.mxu0 0.0
        %364 = vmatprep.subr.mxu0 0.0
        %365 = vmatpush1.msra.mxu0 0.0
        %366 = vmatprep.subr.mxu0 0.0
        %367 = vmatpush1.msra.mxu0 0.0
        %368 = vmatprep.subr.mxu0 0.0
        %369 = vmatpush1.msra.mxu0 0.0
        %370 = vmatprep.subr.mxu0 0.0
        %371 = vmatpush1.msra.mxu0 0.0
        %372 = vmatprep.subr.mxu0 0.0
        %373 = vmatpush1.msra.mxu0 0.0
        %374 = vmatprep.subr.mxu0 0.0
        %375 = vmatpush1.msra.mxu0 0.0
        %376 = vmatprep.subr.mxu0 0.0
        %377 = vmatpush1.msra.mxu0 0.0
        %378 = vmatprep.subr.mxu0 0.0
        %379 = vmatpush1.msra.mxu0 0.0
        %380 = vmatprep.subr.mxu0 0.0
        %381 = vmatpush1.msra.mxu0 0.0
        %382 = vmatprep.subr.mxu0 0.0
        %383 = vmatpush1.msra.mxu0 0.0
        %384 = vmatprep.subr.mxu0 0.0
        %385 = vmatpush1.msra.mxu0 0.0
        %386 = vmatprep.subr.mxu0 0.0
        %387 = vmatpush1.msra.mxu0 0.0
        %388 = vmatprep.subr.mxu0 0.0
        %389 = vmatpush1.msra.mxu0 0.0
        %390 = vmatprep.subr.mxu0 0.0
        %391 = vmatpush1.msra.mxu0 0.0
        %392 = vmatprep.subr.mxu0 0.0
        %393 = vmatpush1.msra.mxu0 0.0
        %394 = vmatprep.subr.mxu0 0.0
        %395 = vmatpush1.msra.mxu0 0.0
        %396 = vmatprep.subr.mxu0 0.0
        %397 = vmatpush1.msra.mxu0 0.0
        %398 = vmatprep.subr.mxu0 0.0
        %399 = vmatpush1.msra.mxu0 0.0
        %400 = vmatprep.subr.mxu0 0.0
        %401 = vmatpush1.msra.mxu0 0.0
        %402 = vmatprep.subr.mxu0 0.0
        %403 = vmatpush1.msra.mxu0 0.0
        %404 = vmatprep.subr.mxu0 0.0
        %405 = vmatpush1.msra.mxu0 0.0
        %406 = vmatprep.mubr.f32.mxu0 0.0
        %407 = vmatmul.mubr.f32.gmra.mrb[0].mxu0 %v340
        %v408 = vpop.f32.mrb[0].mxu0
        %v409 = vadd.f32 %v336, %v408
        %v410 = vpop.f32.mrb[0].mxu0
        %411 = vdwg.mxu0
        %v412 = vld [vmem:[%s3] sm:$0xff]
        %v413 = vld [vmem:[%s3 + $0x8] sm:$0xff]
        %v414 = vld [vmem:[%s3 + $0x10] sm:$0xff]
        %v415 = vld [vmem:[%s3 + $0x18] sm:$0xff]
        %v416 = vld [vmem:[%s4] sm:$0x1]
        %v418 = vlaneseq
        %v419 = vshrl.u32 %v418, 7
        %v420 = vsub.s32 0, %v419
        %v421 = vrot.slane %v416, %v420
        %vm423 = vcmask 261120
        %v425 = vsel %vm423, %v409, 0
        %427 = vmatprep.subr.mxu0 0.0
        %428 = vmatpush1.msra.mxu0 %v412
        %429 = vmatprep.subr.mxu0 0.0
        %430 = vmatpush1.msra.mxu0 %v413
        %431 = vmatprep.subr.mxu0 0.0
        %432 = vmatpush1.msra.mxu0 %v414
        %433 = vmatprep.subr.mxu0 0.0
        %434 = vmatpush1.msra.mxu0 %v415
        %435 = vmatprep.subr.mxu0 0.0
        %436 = vmatpush1.msra.mxu0 0.0
        %437 = vmatprep.subr.mxu0 0.0
        %438 = vmatpush1.msra.mxu0 0.0
        %439 = vmatprep.subr.mxu0 0.0
        %440 = vmatpush1.msra.mxu0 0.0
        %441 = vmatprep.subr.mxu0 0.0
        %442 = vmatpush1.msra.mxu0 0.0
        %443 = vmatprep.subr.mxu0 0.0
        %444 = vmatpush1.msra.mxu0 0.0
        %445 = vmatprep.subr.mxu0 0.0
        %446 = vmatpush1.msra.mxu0 0.0
        %447 = vmatprep.subr.mxu0 0.0
        %448 = vmatpush1.msra.mxu0 0.0
        %449 = vmatprep.subr.mxu0 0.0
        %450 = vmatpush1.msra.mxu0 0.0
        %451 = vmatprep.subr.mxu0 0.0
        %452 = vmatpush1.msra.mxu0 0.0
        %453 = vmatprep.subr.mxu0 0.0
        %454 = vmatpush1.msra.mxu0 0.0
        %455 = vmatprep.subr.mxu0 0.0
        %456 = vmatpush1.msra.mxu0 0.0
        %457 = vmatprep.subr.mxu0 0.0
        %458 = vmatpush1.msra.mxu0 0.0
        %459 = vmatprep.subr.mxu0 0.0
        %460 = vmatpush1.msra.mxu0 0.0
        %461 = vmatprep.subr.mxu0 0.0
        %462 = vmatpush1.msra.mxu0 0.0
        %463 = vmatprep.subr.mxu0 0.0
        %464 = vmatpush1.msra.mxu0 0.0
        %465 = vmatprep.subr.mxu0 0.0
        %466 = vmatpush1.msra.mxu0 0.0
        %467 = vmatprep.subr.mxu0 0.0
        %468 = vmatpush1.msra.mxu0 0.0
        %469 = vmatprep.subr.mxu0 0.0
        %470 = vmatpush1.msra.mxu0 0.0
        %471 = vmatprep.subr.mxu0 0.0
        %472 = vmatpush1.msra.mxu0 0.0
        %473 = vmatprep.subr.mxu0 0.0
        %474 = vmatpush1.msra.mxu0 0.0
        %475 = vmatprep.subr.mxu0 0.0
        %476 = vmatpush1.msra.mxu0 0.0
        %477 = vmatprep.subr.mxu0 0.0
        %478 = vmatpush1.msra.mxu0 0.0
        %479 = vmatprep.subr.mxu0 0.0
        %480 = vmatpush1.msra.mxu0 0.0
        %481 = vmatprep.subr.mxu0 0.0
        %482 = vmatpush1.msra.mxu0 0.0
        %483 = vmatprep.subr.mxu0 0.0
        %484 = vmatpush1.msra.mxu0 0.0
        %485 = vmatprep.subr.mxu0 0.0
        %486 = vmatpush1.msra.mxu0 0.0
        %487 = vmatprep.subr.mxu0 0.0
        %488 = vmatpush1.msra.mxu0 0.0
        %489 = vmatprep.subr.mxu0 0.0
        %490 = vmatpush1.msra.mxu0 0.0
        %491 = vmatprep.mubr.f32.mxu0 0.0
        %492 = vmatmul.mubr.f32.gmra.mrb[0].mxu0 %v425
        %v493 = vpop.f32.mrb[0].mxu0
        %v494 = vadd.f32 %v421, %v493
        %v495 = vpop.f32.mrb[0].mxu0
        %496 = vdwg.mxu0
        %v497 = vld [vmem:[%s5] sm:$0xff]
        %v498 = vld [vmem:[%s5 + $0x8] sm:$0xff]
        %v499 = vld [vmem:[%s5 + $0x10] sm:$0xff]
        %v500 = vld [vmem:[%s5 + $0x18] sm:$0xff]
        %v501 = vld [vmem:[%s6] sm:$0x1]
        %v502 = vld [vmem:[%s7] sm:$0x1]
        %v503 = vld [vmem:[%s8] sm:$0x1]
        %505 = vrot.lane.b32.xlu0 %v494, 96
        %v506 = vpop.permute.xlu0 %505
        %vm507 = vcmask 64512
        %v508 = vsel %vm507, %v494, 0
        %v510 = vsel %vm507, %v506, 0
        %512 = vmatprep.subr.mxu0 0.0
        %513 = vmatpush1.xpose.msra.mxu0 %v510
        %514 = vmatprep.subr.mxu0 0.0
        %515 = vmatpush1.xpose.msra.mxu0 0.0
        %516 = vmatprep.subr.mxu0 0.0
        %517 = vmatpush1.xpose.msra.mxu0 0.0
        %518 = vmatprep.subr.mxu0 0.0
        %519 = vmatpush1.xpose.msra.mxu0 0.0
        %520 = vmatprep.subr.mxu0 0.0
        %521 = vmatpush1.xpose.msra.mxu0 0.0
        %522 = vmatprep.subr.mxu0 0.0
        %523 = vmatpush1.xpose.msra.mxu0 0.0
        %524 = vmatprep.subr.mxu0 0.0
        %525 = vmatpush1.xpose.msra.mxu0 0.0
        %526 = vmatprep.subr.mxu0 0.0
        %527 = vmatpush1.xpose.msra.mxu0 0.0
        %528 = vmatprep.subr.mxu0 0.0
        %529 = vmatpush1.xpose.msra.mxu0 0.0
        %530 = vmatprep.subr.mxu0 0.0
        %531 = vmatpush1.xpose.msra.mxu0 0.0
        %532 = vmatprep.subr.mxu0 0.0
        %533 = vmatpush1.xpose.msra.mxu0 0.0
        %534 = vmatprep.subr.mxu0 0.0
        %535 = vmatpush1.xpose.msra.mxu0 0.0
        %536 = vmatprep.subr.mxu0 0.0
        %537 = vmatpush1.xpose.msra.mxu0 0.0
        %538 = vmatprep.subr.mxu0 0.0
        %539 = vmatpush1.xpose.msra.mxu0 0.0
        %540 = vmatprep.subr.mxu0 0.0
        %541 = vmatpush1.xpose.msra.mxu0 0.0
        %542 = vmatprep.subr.mxu0 0.0
        %543 = vmatpush1.xpose.msra.mxu0 0.0
        %544 = vmatprep.subr.mxu0 0.0
        %545 = vmatpush1.xpose.msra.mxu0 0.0
        %546 = vmatprep.subr.mxu0 0.0
        %547 = vmatpush1.xpose.msra.mxu0 0.0
        %548 = vmatprep.subr.mxu0 0.0
        %549 = vmatpush1.xpose.msra.mxu0 0.0
        %550 = vmatprep.subr.mxu0 0.0
        %551 = vmatpush1.xpose.msra.mxu0 0.0
        %552 = vmatprep.subr.mxu0 0.0
        %553 = vmatpush1.xpose.msra.mxu0 0.0
        %554 = vmatprep.subr.mxu0 0.0
        %555 = vmatpush1.xpose.msra.mxu0 0.0
        %556 = vmatprep.subr.mxu0 0.0
        %557 = vmatpush1.xpose.msra.mxu0 0.0
        %558 = vmatprep.subr.mxu0 0.0
        %559 = vmatpush1.xpose.msra.mxu0 0.0
        %560 = vmatprep.subr.mxu0 0.0
        %561 = vmatpush1.xpose.msra.mxu0 0.0
        %562 = vmatprep.subr.mxu0 0.0
        %563 = vmatpush1.xpose.msra.mxu0 0.0
        %564 = vmatprep.subr.mxu0 0.0
        %565 = vmatpush1.xpose.msra.mxu0 0.0
        %566 = vmatprep.subr.mxu0 0.0
        %567 = vmatpush1.xpose.msra.mxu0 0.0
        %568 = vmatprep.subr.mxu0 0.0
        %569 = vmatpush1.xpose.msra.mxu0 0.0
        %570 = vmatprep.subr.mxu0 0.0
        %571 = vmatpush1.xpose.msra.mxu0 0.0
        %572 = vmatprep.subr.mxu0 0.0
        %573 = vmatpush1.xpose.msra.mxu0 0.0
        %574 = vmatprep.subr.mxu0 0.0
        %575 = vmatpush1.xpose.msra.mxu0 0.0
        %576 = vmatprep.mubr.f32.mxu0 0.0
        %577 = vmatmul.mubr.f32.gmra.mrb[0].mxu0 %v508
        %v578 = vpop.f32.mrb[0].mxu0
        %v579 = vadd.f32 0.0, %v578
        %v580 = vpop.f32.mrb[0].mxu0
        %581 = vdwg.mxu0
        %v582 = vmul.f32 %v579, 0.35355338
        %v583 = vsel %vm507, %v582, -inf
        %584 = vmax.xlane.f32.xlu0 %v583
        %v585 = vpop.xlane.xlu0 %584
        %v586 = vsub.f32 %v582, %v585
        %v587 = vmul.f32 %v586, 1.442695
        %v588 = vpow.pop %v587
        %v589 = vsel %vm507, %v588, 0.0
        %590 = vadd.xlane.f32.xlu0 %v589
        %v591 = vpop.xlane.xlu0 %590
        %v592 = vrcp.pop %v591
        %v593 = vmul.f32 %v588, %v592
        %594 = vrot.lane.b32.xlu0 %v494, 64
        %v595 = vpop.permute.xlu0 %594
        %v598 = vsel %vm507, %v593, 0
        %600 = vmatprep.subr.mxu0 0.0
        %601 = vmatpush1.msra.mxu0 %v595
        %602 = vmatprep.subr.mxu0 0.0
        %603 = vmatpush1.msra.mxu0 0.0
        %604 = vmatprep.subr.mxu0 0.0
        %605 = vmatpush1.msra.mxu0 0.0
        %606 = vmatprep.subr.mxu0 0.0
        %607 = vmatpush1.msra.mxu0 0.0
        %608 = vmatprep.subr.mxu0 0.0
        %609 = vmatpush1.msra.mxu0 0.0
        %610 = vmatprep.subr.mxu0 0.0
        %611 = vmatpush1.msra.mxu0 0.0
        %612 = vmatprep.subr.mxu0 0.0
        %613 = vmatpush1.msra.mxu0 0.0
        %614 = vmatprep.subr.mxu0 0.0
        %615 = vmatpush1.msra.mxu0 0.0
        %616 = vmatprep.subr.mxu0 0.0
        %617 = vmatpush1.msra.mxu0 0.0
        %618 = vmatprep.subr.mxu0 0.0
        %619 = vmatpush1.msra.mxu0 0.0
        %620 = vmatprep.subr.mxu0 0.0
        %621 = vmatpush1.msra.mxu0 0.0
        %622 = vmatprep.subr.mxu0 0.0
        %623 = vmatpush1.msra.mxu0 0.0
        %624 = vmatprep.subr.mxu0 0.0
        %625 = vmatpush1.msra.mxu0 0.0
        %626 = vmatprep.subr.mxu0 0.0
        %627 = vmatpush1.msra.mxu0 0.0
        %628 = vmatprep.subr.mxu0 0.0
        %629 = vmatpush1.msra.mxu0 0.0
        %630 = vmatprep.subr.mxu0 0.0
        %631 = vmatpush1.msra.mxu0 0.0
        %632 = vmatprep.subr.mxu0 0.0
        %633 = vmatpush1.msra.mxu0 0.0
        %634 = vmatprep.subr.mxu0 0.0
        %635 = vmatpush1.msra.mxu0 0.0
        %636 = vmatprep.subr.mxu0 0.0
        %637 = vmatpush1.msra.mxu0 0.0
        %638 = vmatprep.subr.mxu0 0.0
        %639 = vmatpush1.msra.mxu0 0.0
        %640 = vmatprep.subr.mxu0 0.0
        %641 = vmatpush1.msra.mxu0 0.0
        %642 = vmatprep.subr.mxu0 0.0
        %643 = vmatpush1.msra.mxu0 0.0
        %644 = vmatprep.subr.mxu0 0.0
        %645 = vmatpush1.msra.mxu0 0.0
        %646 = vmatprep.subr.mxu0 0.0
        %647 = vmatpush1.msra.mxu0 0.0
        %648 = vmatprep.subr.mxu0 0.0
        %649 = vmatpush1.msra.mxu0 0.0
        %650 = vmatprep.subr.mxu0 0.0
        %651 = vmatpush1.msra.mxu0 0.0
        %652 = vmatprep.subr.mxu0 0.0
        %653 = vmatpush1.msra.mxu0 0.0
        %654 = vmatprep.subr.mxu0 0.0
        %655 = vmatpush1.msra.mxu0 0.0
        %656 = vmatprep.subr.mxu0 0.0
        %657 = vmatpush1.msra.mxu0 0.0
        %658 = vmatprep.subr.mxu0 0.0
        %659 = vmatpush1.msra.mxu0 0.0
        %660 = vmatprep.subr.mxu0 0.0
        %661 = vmatpush1.msra.mxu0 0.0
        %662 = vmatprep.subr.mxu0 0.0
        %663 = vmatpush1.msra.mxu0 0.0
        %664 = vmatprep.mubr.f32.mxu0 0.0
        %665 = vmatmul.mubr.f32.gmra.mrb[0].mxu0 %v598
        %v666 = vpop.f32.mrb[0].mxu0
        %v667 = vadd.f32 0.0, %v666
        %v668 = vpop.f32.mrb[0].mxu0
        %669 = vdwg.mxu0
        %670 = vrot.lane.b32.xlu0 %v494, 120
        %v671 = vpop.permute.xlu0 %670
        %672 = vrot.lane.b32.xlu0 %v494, 88
        %v673 = vpop.permute.xlu0 %672
        %v674 = vsel %vm507, %v671, 0
        %v676 = vsel %vm507, %v673, 0
        %678 = vmatprep.subr.mxu0 0.0
        %679 = vmatpush1.xpose.msra.mxu0 %v676
        %680 = vmatprep.subr.mxu0 0.0
        %681 = vmatpush1.xpose.msra.mxu0 0.0
        %682 = vmatprep.subr.mxu0 0.0
        %683 = vmatpush1.xpose.msra.mxu0 0.0
        %684 = vmatprep.subr.mxu0 0.0
        %685 = vmatpush1.xpose.msra.mxu0 0.0
        %686 = vmatprep.subr.mxu0 0.0
        %687 = vmatpush1.xpose.msra.mxu0 0.0
        %688 = vmatprep.subr.mxu0 0.0
        %689 = vmatpush1.xpose.msra.mxu0 0.0
        %690 = vmatprep.subr.mxu0 0.0
        %691 = vmatpush1.xpose.msra.mxu0 0.0
        %692 = vmatprep.subr.mxu0 0.0
        %693 = vmatpush1.xpose.msra.mxu0 0.0
        %694 = vmatprep.subr.mxu0 0.0
        %695 = vmatpush1.xpose.msra.mxu0 0.0
        %696 = vmatprep.subr.mxu0 0.0
        %697 = vmatpush1.xpose.msra.mxu0 0.0
        %698 = vmatprep.subr.mxu0 0.0
        %699 = vmatpush1.xpose.msra.mxu0 0.0
        %700 = vmatprep.subr.mxu0 0.0
        %701 = vmatpush1.xpose.msra.mxu0 0.0
        %702 = vmatprep.subr.mxu0 0.0
        %703 = vmatpush1.xpose.msra.mxu0 0.0
        %704 = vmatprep.subr.mxu0 0.0
        %705 = vmatpush1.xpose.msra.mxu0 0.0
        %706 = vmatprep.subr.mxu0 0.0
        %707 = vmatpush1.xpose.msra.mxu0 0.0
        %708 = vmatprep.subr.mxu0 0.0
        %709 = vmatpush1.xpose.msra.mxu0 0.0
        %710 = vmatprep.subr.mxu0 0.0
        %711 = vmatpush1.xpose.msra.mxu0 0.0
        %712 = vmatprep.subr.mxu0 0.0
        %713 = vmatpush1.xpose.msra.mxu0 0.0
        %714 = vmatprep.subr.mxu0 0.0
        %715 = vmatpush1.xpose.msra.mxu0 0.0
        %716 = vmatprep.subr.mxu0 0.0
        %717 = vmatpush1.xpose.msra.mxu0 0.0
        %718 = vmatprep.subr.mxu0 0.0
        %719 = vmatpush1.xpose.msra.mxu0 0.0
        %720 = vmatprep.subr.mxu0 0.0
        %721 = vmatpush1.xpose.msra.mxu0 0.0
        %722 = vmatprep.subr.mxu0 0.0
        %723 = vmatpush1.xpose.msra.mxu0 0.0
        %724 = vmatprep.subr.mxu0 0.0
        %725 = vmatpush1.xpose.msra.mxu0 0.0
        %726 = vmatprep.subr.mxu0 0.0
        %727 = vmatpush1.xpose.msra.mxu0 0.0
        %728 = vmatprep.subr.mxu0 0.0
        %729 = vmatpush1.xpose.msra.mxu0 0.0
        %730 = vmatprep.subr.mxu0 0.0
        %731 = vmatpush1.xpose.msra.mxu0 0.0
        %732 = vmatprep.subr.mxu0 0.0
        %733 = vmatpush1.xpose.msra.mxu0 0.0
        %734 = vmatprep.subr.mxu0 0.0
        %735 = vmatpush1.xpose.msra.mxu0 0.0
        %736 = vmatprep.subr.mxu0 0.0
        %737 = vmatpush1.xpose.msra.mxu0 0.0
        %738 = vmatprep.subr.mxu0 0.0
        %739 = vmatpush1.xpose.msra.mxu0 0.0
        %740 = vmatprep.subr.mxu0 0.0
        %741 = vmatpush1.xpose.msra.mxu0 0.0
        %742 = vmatprep.mubr.f32.mxu0 0.0
        %743 = vmatmul.mubr.f32.gmra.mrb[0].mxu0 %v674
        %v744 = vpop.f32.mrb[0].mxu0
        %v745 = vadd.f32 0.0, %v744
        %v746 = vpop.f32.mrb[0].mxu0
        %747 = vdwg.mxu0
        %v748 = vmul.f32 %v745, 0.35355338
        %v749 = vsel %vm507, %v748, -inf
        %750 = vmax.xlane.f32.xlu0 %v749
        %v751 = vpop.xlane.xlu0 %750
        %v752 = vsub.f32 %v748, %v751
        %v753 = vmul.f32 %v752, 1.442695
        %v754 = vpow.pop %v753
        %v755 = vsel %vm507, %v754, 0.0
        %756 = vadd.xlane.f32.xlu0 %v755
        %v757 = vpop.xlane.xlu0 %756
        %v758 = vrcp.pop %v757
        %v759 = vmul.f32 %v754, %v758
        %760 = vrot.lane.b32.xlu0 %v494, 56
        %v761 = vpop.permute.xlu0 %760
        %v764 = vsel %vm507, %v759, 0
        %766 = vmatprep.subr.mxu0 0.0
        %767 = vmatpush1.msra.mxu0 %v761
        %768 = vmatprep.subr.mxu0 0.0
        %769 = vmatpush1.msra.mxu0 0.0
        %770 = vmatprep.subr.mxu0 0.0
        %771 = vmatpush1.msra.mxu0 0.0
        %772 = vmatprep.subr.mxu0 0.0
        %773 = vmatpush1.msra.mxu0 0.0
        %774 = vmatprep.subr.mxu0 0.0
        %775 = vmatpush1.msra.mxu0 0.0
        %776 = vmatprep.subr.mxu0 0.0
        %777 = vmatpush1.msra.mxu0 0.0
        %778 = vmatprep.subr.mxu0 0.0
        %779 = vmatpush1.msra.mxu0 0.0
        %780 = vmatprep.subr.mxu0 0.0
        %781 = vmatpush1.msra.mxu0 0.0
        %782 = vmatprep.subr.mxu0 0.0
        %783 = vmatpush1.msra.mxu0 0.0
        %784 = vmatprep.subr.mxu0 0.0
        %785 = vmatpush1.msra.mxu0 0.0
        %786 = vmatprep.subr.mxu0 0.0
        %787 = vmatpush1.msra.mxu0 0.0
        %788 = vmatprep.subr.mxu0 0.0
        %789 = vmatpush1.msra.mxu0 0.0
        %790 = vmatprep.subr.mxu0 0.0
        %791 = vmatpush1.msra.mxu0 0.0
        %792 = vmatprep.subr.mxu0 0.0
        %793 = vmatpush1.msra.mxu0 0.0
        %794 = vmatprep.subr.mxu0 0.0
        %795 = vmatpush1.msra.mxu0 0.0
        %796 = vmatprep.subr.mxu0 0.0
        %797 = vmatpush1.msra.mxu0 0.0
        %798 = vmatprep.subr.mxu0 0.0
        %799 = vmatpush1.msra.mxu0 0.0
        %800 = vmatprep.subr.mxu0 0.0
        %801 = vmatpush1.msra.mxu0 0.0
        %802 = vmatprep.subr.mxu0 0.0
        %803 = vmatpush1.msra.mxu0 0.0
        %804 = vmatprep.subr.mxu0 0.0
        %805 = vmatpush1.msra.mxu0 0.0
        %806 = vmatprep.subr.mxu0 0.0
        %807 = vmatpush1.msra.mxu0 0.0
        %808 = vmatprep.subr.mxu0 0.0
        %809 = vmatpush1.msra.mxu0 0.0
        %810 = vmatprep.subr.mxu0 0.0
        %811 = vmatpush1.msra.mxu0 0.0
        %812 = vmatprep.subr.mxu0 0.0
        %813 = vmatpush1.msra.mxu0 0.0
        %814 = vmatprep.subr.mxu0 0.0
        %815 = vmatpush1.msra.mxu0 0.0
        %816 = vmatprep.subr.mxu0 0.0
        %817 = vmatpush1.msra.mxu0 0.0
        %818 = vmatprep.subr.mxu0 0.0
        %819 = vmatpush1.msra.mxu0 0.0
        %820 = vmatprep.subr.mxu0 0.0
        %821 = vmatpush1.msra.mxu0 0.0
        %822 = vmatprep.subr.mxu0 0.0
        %823 = vmatpush1.msra.mxu0 0.0
        %824 = vmatprep.subr.mxu0 0.0
        %825 = vmatpush1.msra.mxu0 0.0
        %826 = vmatprep.subr.mxu0 0.0
        %827 = vmatpush1.msra.mxu0 0.0
        %828 = vmatprep.subr.mxu0 0.0
        %829 = vmatpush1.msra.mxu0 0.0
        %830 = vmatprep.mubr.f32.mxu0 0.0
        %831 = vmatmul.mubr.f32.gmra.mrb[0].mxu0 %v764
        %v832 = vpop.f32.mrb[0].mxu0
        %v833 = vadd.f32 0.0, %v832
        %v834 = vpop.f32.mrb[0].mxu0
        %835 = vdwg.mxu0
        %836 = vrot.lane.b32.xlu0 %v494, 112
        %v837 = vpop.permute.xlu0 %836
        %838 = vrot.lane.b32.xlu0 %v494, 80
        %v839 = vpop.permute.xlu0 %838
        %v840 = vsel %vm507, %v837, 0
        %v842 = vsel %vm507, %v839, 0
        %844 = vmatprep.subr.mxu0 0.0
        %845 = vmatpush1.xpose.msra.mxu0 %v842
        %846 = vmatprep.subr.mxu0 0.0
        %847 = vmatpush1.xpose.msra.mxu0 0.0
        %848 = vmatprep.subr.mxu0 0.0
        %849 = vmatpush1.xpose.msra.mxu0 0.0
        %850 = vmatprep.subr.mxu0 0.0
        %851 = vmatpush1.xpose.msra.mxu0 0.0
        %852 = vmatprep.subr.mxu0 0.0
        %853 = vmatpush1.xpose.msra.mxu0 0.0
        %854 = vmatprep.subr.mxu0 0.0
        %855 = vmatpush1.xpose.msra.mxu0 0.0
        %856 = vmatprep.subr.mxu0 0.0
        %857 = vmatpush1.xpose.msra.mxu0 0.0
        %858 = vmatprep.subr.mxu0 0.0
        %859 = vmatpush1.xpose.msra.mxu0 0.0
        %860 = vmatprep.subr.mxu0 0.0
        %861 = vmatpush1.xpose.msra.mxu0 0.0
        %862 = vmatprep.subr.mxu0 0.0
        %863 = vmatpush1.xpose.msra.mxu0 0.0
        %864 = vmatprep.subr.mxu0 0.0
        %865 = vmatpush1.xpose.msra.mxu0 0.0
        %866 = vmatprep.subr.mxu0 0.0
        %867 = vmatpush1.xpose.msra.mxu0 0.0
        %868 = vmatprep.subr.mxu0 0.0
        %869 = vmatpush1.xpose.msra.mxu0 0.0
        %870 = vmatprep.subr.mxu0 0.0
        %871 = vmatpush1.xpose.msra.mxu0 0.0
        %872 = vmatprep.subr.mxu0 0.0
        %873 = vmatpush1.xpose.msra.mxu0 0.0
        %874 = vmatprep.subr.mxu0 0.0
        %875 = vmatpush1.xpose.msra.mxu0 0.0
        %876 = vmatprep.subr.mxu0 0.0
        %877 = vmatpush1.xpose.msra.mxu0 0.0
        %878 = vmatprep.subr.mxu0 0.0
        %879 = vmatpush1.xpose.msra.mxu0 0.0
        %880 = vmatprep.subr.mxu0 0.0
        %881 = vmatpush1.xpose.msra.mxu0 0.0
        %882 = vmatprep.subr.mxu0 0.0
        %883 = vmatpush1.xpose.msra.mxu0 0.0
        %884 = vmatprep.subr.mxu0 0.0
        %885 = vmatpush1.xpose.msra.mxu0 0.0
        %886 = vmatprep.subr.mxu0 0.0
        %887 = vmatpush1.xpose.msra.mxu0 0.0
        %888 = vmatprep.subr.mxu0 0.0
        %889 = vmatpush1.xpose.msra.mxu0 0.0
        %890 = vmatprep.subr.mxu0 0.0
        %891 = vmatpush1.xpose.msra.mxu0 0.0
        %892 = vmatprep.subr.mxu0 0.0
        %893 = vmatpush1.xpose.msra.mxu0 0.0
        %894 = vmatprep.subr.mxu0 0.0
        %895 = vmatpush1.xpose.msra.mxu0 0.0
        %896 = vmatprep.subr.mxu0 0.0
        %897 = vmatpush1.xpose.msra.mxu0 0.0
        %898 = vmatprep.subr.mxu0 0.0
        %899 = vmatpush1.xpose.msra.mxu0 0.0
        %900 = vmatprep.subr.mxu0 0.0
        %901 = vmatpush1.xpose.msra.mxu0 0.0
        %902 = vmatprep.subr.mxu0 0.0
        %903 = vmatpush1.xpose.msra.mxu0 0.0
        %904 = vmatprep.subr.mxu0 0.0
        %905 = vmatpush1.xpose.msra.mxu0 0.0
        %906 = vmatprep.subr.mxu0 0.0
        %907 = vmatpush1.xpose.msra.mxu0 0.0
        %908 = vmatprep.mubr.f32.mxu0 0.0
        %909 = vmatmul.mubr.f32.gmra.mrb[0].mxu0 %v840
        %v910 = vpop.f32.mrb[0].mxu0
        %v911 = vadd.f32 0.0, %v910
        %v912 = vpop.f32.mrb[0].mxu0
        %913 = vdwg.mxu0
        %v914 = vmul.f32 %v911, 0.35355338
        %v915 = vsel %vm507, %v914, -inf
        %916 = vmax.xlane.f32.xlu0 %v915
        %v917 = vpop.xlane.xlu0 %916
        %v918 = vsub.f32 %v914, %v917
        %v919 = vmul.f32 %v918, 1.442695
        %v920 = vpow.pop %v919
        %v921 = vsel %vm507, %v920, 0.0
        %922 = vadd.xlane.f32.xlu0 %v921
        %v923 = vpop.xlane.xlu0 %922
        %v924 = vrcp.pop %v923
        %v925 = vmul.f32 %v920, %v924
        %926 = vrot.lane.b32.xlu0 %v494, 48
        %v927 = vpop.permute.xlu0 %926
        %v930 = vsel %vm507, %v925, 0
        %932 = vmatprep.subr.mxu0 0.0
        %933 = vmatpush1.msra.mxu0 %v927
        %934 = vmatprep.subr.mxu0 0.0
        %935 = vmatpush1.msra.mxu0 0.0
        %936 = vmatprep.subr.mxu0 0.0
        %937 = vmatpush1.msra.mxu0 0.0
        %938 = vmatprep.subr.mxu0 0.0
        %939 = vmatpush1.msra.mxu0 0.0
        %940 = vmatprep.subr.mxu0 0.0
        %941 = vmatpush1.msra.mxu0 0.0
        %942 = vmatprep.subr.mxu0 0.0
        %943 = vmatpush1.msra.mxu0 0.0
        %944 = vmatprep.subr.mxu0 0.0
        %945 = vmatpush1.msra.mxu0 0.0
        %946 = vmatprep.subr.mxu0 0.0
        %947 = vmatpush1.msra.mxu0 0.0
        %948 = vmatprep.subr.mxu0 0.0
        %949 = vmatpush1.msra.mxu0 0.0
        %950 = vmatprep.subr.mxu0 0.0
        %951 = vmatpush1.msra.mxu0 0.0
        %952 = vmatprep.subr.mxu0 0.0
        %953 = vmatpush1.msra.mxu0 0.0
        %954 = vmatprep.subr.mxu0 0.0
        %955 = vmatpush1.msra.mxu0 0.0
        %956 = vmatprep.subr.mxu0 0.0
        %957 = vmatpush1.msra.mxu0 0.0
        %958 = vmatprep.subr.mxu0 0.0
        %959 = vmatpush1.msra.mxu0 0.0
        %960 = vmatprep.subr.mxu0 0.0
        %961 = vmatpush1.msra.mxu0 0.0
        %962 = vmatprep.subr.mxu0 0.0
        %963 = vmatpush1.msra.mxu0 0.0
        %964 = vmatprep.subr.mxu0 0.0
        %965 = vmatpush1.msra.mxu0 0.0
        %966 = vmatprep.subr.mxu0 0.0
        %967 = vmatpush1.msra.mxu0 0.0
        %968 = vmatprep.subr.mxu0 0.0
        %969 = vmatpush1.msra.mxu0 0.0
        %970 = vmatprep.subr.mxu0 0.0
        %971 = vmatpush1.msra.mxu0 0.0
        %972 = vmatprep.subr.mxu0 0.0
        %973 = vmatpush1.msra.mxu0 0.0
        %974 = vmatprep.subr.mxu0 0.0
        %975 = vmatpush1.msra.mxu0 0.0
        %976 = vmatprep.subr.mxu0 0.0
        %977 = vmatpush1.msra.mxu0 0.0
        %978 = vmatprep.subr.mxu0 0.0
        %979 = vmatpush1.msra.mxu0 0.0
        %980 = vmatprep.subr.mxu0 0.0
        %981 = vmatpush1.msra.mxu0 0.0
        %982 = vmatprep.subr.mxu0 0.0
        %983 = vmatpush1.msra.mxu0 0.0
        %984 = vmatprep.subr.mxu0 0.0
        %985 = vmatpush1.msra.mxu0 0.0
        %986 = vmatprep.subr.mxu0 0.0
        %987 = vmatpush1.msra.mxu0 0.0
        %988 = vmatprep.subr.mxu0 0.0
        %989 = vmatpush1.msra.mxu0 0.0
        %990 = vmatprep.subr.mxu0 0.0
        %991 = vmatpush1.msra.mxu0 0.0
        %992 = vmatprep.subr.mxu0 0.0
        %993 = vmatpush1.msra.mxu0 0.0
        %994 = vmatprep.subr.mxu0 0.0
        %995 = vmatpush1.msra.mxu0 0.0
        %996 = vmatprep.mubr.f32.mxu0 0.0
        %997 = vmatmul.mubr.f32.gmra.mrb[0].mxu0 %v930
        %v998 = vpop.f32.mrb[0].mxu0
        %v999 = vadd.f32 0.0, %v998
        %v1000 = vpop.f32.mrb[0].mxu0
        %1001 = vdwg.mxu0
        %1002 = vrot.lane.b32.xlu0 %v494, 104
        %v1003 = vpop.permute.xlu0 %1002
        %1004 = vrot.lane.b32.xlu0 %v494, 72
        %v1005 = vpop.permute.xlu0 %1004
        %v1006 = vsel %vm507, %v1003, 0
        %v1008 = vsel %vm507, %v1005, 0
        %1010 = vmatprep.subr.mxu0 0.0
        %1011 = vmatpush1.xpose.msra.mxu0 %v1008
        %1012 = vmatprep.subr.mxu0 0.0
        %1013 = vmatpush1.xpose.msra.mxu0 0.0
        %1014 = vmatprep.subr.mxu0 0.0
        %1015 = vmatpush1.xpose.msra.mxu0 0.0
        %1016 = vmatprep.subr.mxu0 0.0
        %1017 = vmatpush1.xpose.msra.mxu0 0.0
        %1018 = vmatprep.subr.mxu0 0.0
        %1019 = vmatpush1.xpose.msra.mxu0 0.0
        %1020 = vmatprep.subr.mxu0 0.0
        %1021 = vmatpush1.xpose.msra.mxu0 0.0
        %1022 = vmatprep.subr.mxu0 0.0
        %1023 = vmatpush1.xpose.msra.mxu0 0.0
        %1024 = vmatprep.subr.mxu0 0.0
        %1025 = vmatpush1.xpose.msra.mxu0 0.0
        %1026 = vmatprep.subr.mxu0 0.0
        %1027 = vmatpush1.xpose.msra.mxu0 0.0
        %1028 = vmatprep.subr.mxu0 0.0
        %1029 = vmatpush1.xpose.msra.mxu0 0.0
        %1030 = vmatprep.subr.mxu0 0.0
        %1031 = vmatpush1.xpose.msra.mxu0 0.0
        %1032 = vmatprep.subr.mxu0 0.0
        %1033 = vmatpush1.xpose.msra.mxu0 0.0
        %1034 = vmatprep.subr.mxu0 0.0
        %1035 = vmatpush1.xpose.msra.mxu0 0.0
        %1036 = vmatprep.subr.mxu0 0.0
        %1037 = vmatpush1.xpose.msra.mxu0 0.0
        %1038 = vmatprep.subr.mxu0 0.0
        %1039 = vmatpush1.xpose.msra.mxu0 0.0
        %1040 = vmatprep.subr.mxu0 0.0
        %1041 = vmatpush1.xpose.msra.mxu0 0.0
        %1042 = vmatprep.subr.mxu0 0.0
        %1043 = vmatpush1.xpose.msra.mxu0 0.0
        %1044 = vmatprep.subr.mxu0 0.0
        %1045 = vmatpush1.xpose.msra.mxu0 0.0
        %1046 = vmatprep.subr.mxu0 0.0
        %1047 = vmatpush1.xpose.msra.mxu0 0.0
        %1048 = vmatprep.subr.mxu0 0.0
        %1049 = vmatpush1.xpose.msra.mxu0 0.0
        %1050 = vmatprep.subr.mxu0 0.0
        %1051 = vmatpush1.xpose.msra.mxu0 0.0
        %1052 = vmatprep.subr.mxu0 0.0
        %1053 = vmatpush1.xpose.msra.mxu0 0.0
        %1054 = vmatprep.subr.mxu0 0.0
        %1055 = vmatpush1.xpose.msra.mxu0 0.0
        %1056 = vmatprep.subr.mxu0 0.0
        %1057 = vmatpush1.xpose.msra.mxu0 0.0
        %1058 = vmatprep.subr.mxu0 0.0
        %1059 = vmatpush1.xpose.msra.mxu0 0.0
        %1060 = vmatprep.subr.mxu0 0.0
        %1061 = vmatpush1.xpose.msra.mxu0 0.0
        %1062 = vmatprep.subr.mxu0 0.0
        %1063 = vmatpush1.xpose.msra.mxu0 0.0
        %1064 = vmatprep.subr.mxu0 0.0
        %1065 = vmatpush1.xpose.msra.mxu0 0.0
        %1066 = vmatprep.subr.mxu0 0.0
        %1067 = vmatpush1.xpose.msra.mxu0 0.0
        %1068 = vmatprep.subr.mxu0 0.0
        %1069 = vmatpush1.xpose.msra.mxu0 0.0
        %1070 = vmatprep.subr.mxu0 0.0
        %1071 = vmatpush1.xpose.msra.mxu0 0.0
        %1072 = vmatprep.subr.mxu0 0.0
        %1073 = vmatpush1.xpose.msra.mxu0 0.0
        %1074 = vmatprep.mubr.f32.mxu0 0.0
        %1075 = vmatmul.mubr.f32.gmra.mrb[0].mxu0 %v1006
        %v1076 = vpop.f32.mrb[0].mxu0
        %v1077 = vadd.f32 0.0, %v1076
        %v1078 = vpop.f32.mrb[0].mxu0
        %1079 = vdwg.mxu0
        %v1080 = vmul.f32 %v1077, 0.35355338
        %v1081 = vsel %vm507, %v1080, -inf
        %1082 = vmax.xlane.f32.xlu0 %v1081
        %v1083 = vpop.xlane.xlu0 %1082
        %v1084 = vsub.f32 %v1080, %v1083
        %v1085 = vmul.f32 %v1084, 1.442695
        %v1086 = vpow.pop %v1085
        %v1087 = vsel %vm507, %v1086, 0.0
        %1088 = vadd.xlane.f32.xlu0 %v1087
        %v1089 = vpop.xlane.xlu0 %1088
        %v1090 = vrcp.pop %v1089
        %v1091 = vmul.f32 %v1086, %v1090
        %1092 = vrot.lane.b32.xlu0 %v494, 40
        %v1093 = vpop.permute.xlu0 %1092
        %v1096 = vsel %vm507, %v1091, 0
        %1098 = vmatprep.subr.mxu0 0.0
        %1099 = vmatpush1.msra.mxu0 %v1093
        %1100 = vmatprep.subr.mxu0 0.0
        %1101 = vmatpush1.msra.mxu0 0.0
        %1102 = vmatprep.subr.mxu0 0.0
        %1103 = vmatpush1.msra.mxu0 0.0
        %1104 = vmatprep.subr.mxu0 0.0
        %1105 = vmatpush1.msra.mxu0 0.0
        %1106 = vmatprep.subr.mxu0 0.0
        %1107 = vmatpush1.msra.mxu0 0.0
        %1108 = vmatprep.subr.mxu0 0.0
        %1109 = vmatpush1.msra.mxu0 0.0
        %1110 = vmatprep.subr.mxu0 0.0
        %1111 = vmatpush1.msra.mxu0 0.0
        %1112 = vmatprep.subr.mxu0 0.0
        %1113 = vmatpush1.msra.mxu0 0.0
        %1114 = vmatprep.subr.mxu0 0.0
        %1115 = vmatpush1.msra.mxu0 0.0
        %1116 = vmatprep.subr.mxu0 0.0
        %1117 = vmatpush1.msra.mxu0 0.0
        %1118 = vmatprep.subr.mxu0 0.0
        %1119 = vmatpush1.msra.mxu0 0.0
        %1120 = vmatprep.subr.mxu0 0.0
        %1121 = vmatpush1.msra.mxu0 0.0
        %1122 = vmatprep.subr.mxu0 0.0
        %1123 = vmatpush1.msra.mxu0 0.0
        %1124 = vmatprep.subr.mxu0 0.0
        %1125 = vmatpush1.msra.mxu0 0.0
        %1126 = vmatprep.subr.mxu0 0.0
        %1127 = vmatpush1.msra.mxu0 0.0
        %1128 = vmatprep.subr.mxu0 0.0
        %1129 = vmatpush1.msra.mxu0 0.0
        %1130 = vmatprep.subr.mxu0 0.0
        %1131 = vmatpush1.msra.mxu0 0.0
        %1132 = vmatprep.subr.mxu0 0.0
        %1133 = vmatpush1.msra.mxu0 0.0
        %1134 = vmatprep.subr.mxu0 0.0
        %1135 = vmatpush1.msra.mxu0 0.0
        %1136 = vmatprep.subr.mxu0 0.0
        %1137 = vmatpush1.msra.mxu0 0.0
        %1138 = vmatprep.subr.mxu0 0.0
        %1139 = vmatpush1.msra.mxu0 0.0
        %1140 = vmatprep.subr.mxu0 0.0
        %1141 = vmatpush1.msra.mxu0 0.0
        %1142 = vmatprep.subr.mxu0 0.0
        %1143 = vmatpush1.msra.mxu0 0.0
        %1144 = vmatprep.subr.mxu0 0.0
        %1145 = vmatpush1.msra.mxu0 0.0
        %1146 = vmatprep.subr.mxu0 0.0
        %1147 = vmatpush1.msra.mxu0 0.0
        %1148 = vmatprep.subr.mxu0 0.0
        %1149 = vmatpush1.msra.mxu0 0.0
        %1150 = vmatprep.subr.mxu0 0.0
        %1151 = vmatpush1.msra.mxu0 0.0
        %1152 = vmatprep.subr.mxu0 0.0
        %1153 = vmatpush1.msra.mxu0 0.0
        %1154 = vmatprep.subr.mxu0 0.0
        %1155 = vmatpush1.msra.mxu0 0.0
        %1156 = vmatprep.subr.mxu0 0.0
        %1157 = vmatpush1.msra.mxu0 0.0
        %1158 = vmatprep.subr.mxu0 0.0
        %1159 = vmatpush1.msra.mxu0 0.0
        %1160 = vmatprep.subr.mxu0 0.0
        %1161 = vmatpush1.msra.mxu0 0.0
        %1162 = vmatprep.mubr.f32.mxu0 0.0
        %1163 = vmatmul.mubr.f32.gmra.mrb[0].mxu0 %v1096
        %v1164 = vpop.f32.mrb[0].mxu0
        %v1165 = vadd.f32 0.0, %v1164
        %v1166 = vpop.f32.mrb[0].mxu0
        %1167 = vdwg.mxu0
        %1169 = vrot.lane.b32.xlu0 %v833, 8
        %v1170 = vpop.permute.xlu0 %1169
        %1173 = vrot.lane.b32.xlu0 %v999, 16
        %v1174 = vpop.permute.xlu0 %1173
        %1177 = vrot.lane.b32.xlu0 %v1165, 24
        %v1178 = vpop.permute.xlu0 %1177
        %v1180 = vsel %vm507, %v667, %v1170
        %v1181 = vsel %vm338, %v1180, %v1174
        %vm1182 = vcmask 195584
        %v1183 = vsel %vm1182, %v1181, %v1178
        %v1185 = vlaneseq
        %v1186 = vshrl.u32 %v1185, 7
        %v1187 = vsub.s32 0, %v1186
        %v1188 = vrot.slane %v501, %v1187
        %v1191 = vsel %vm423, %v1183, 0
        %1193 = vmatprep.subr.mxu0 0.0
        %1194 = vmatpush1.msra.mxu0 %v497
        %1195 = vmatprep.subr.mxu0 0.0
        %1196 = vmatpush1.msra.mxu0 %v498
        %1197 = vmatprep.subr.mxu0 0.0
        %1198 = vmatpush1.msra.mxu0 %v499
        %1199 = vmatprep.subr.mxu0 0.0
        %1200 = vmatpush1.msra.mxu0 %v500
        %1201 = vmatprep.subr.mxu0 0.0
        %1202 = vmatpush1.msra.mxu0 0.0
        %1203 = vmatprep.subr.mxu0 0.0
        %1204 = vmatpush1.msra.mxu0 0.0
        %1205 = vmatprep.subr.mxu0 0.0
        %1206 = vmatpush1.msra.mxu0 0.0
        %1207 = vmatprep.subr.mxu0 0.0
        %1208 = vmatpush1.msra.mxu0 0.0
        %1209 = vmatprep.subr.mxu0 0.0
        %1210 = vmatpush1.msra.mxu0 0.0
        %1211 = vmatprep.subr.mxu0 0.0
        %1212 = vmatpush1.msra.mxu0 0.0
        %1213 = vmatprep.subr.mxu0 0.0
        %1214 = vmatpush1.msra.mxu0 0.0
        %1215 = vmatprep.subr.mxu0 0.0
        %1216 = vmatpush1.msra.mxu0 0.0
        %1217 = vmatprep.subr.mxu0 0.0
        %1218 = vmatpush1.msra.mxu0 0.0
        %1219 = vmatprep.subr.mxu0 0.0
        %1220 = vmatpush1.msra.mxu0 0.0
        %1221 = vmatprep.subr.mxu0 0.0
        %1222 = vmatpush1.msra.mxu0 0.0
        %1223 = vmatprep.subr.mxu0 0.0
        %1224 = vmatpush1.msra.mxu0 0.0
        %1225 = vmatprep.subr.mxu0 0.0
        %1226 = vmatpush1.msra.mxu0 0.0
        %1227 = vmatprep.subr.mxu0 0.0
        %1228 = vmatpush1.msra.mxu0 0.0
        %1229 = vmatprep.subr.mxu0 0.0
        %1230 = vmatpush1.msra.mxu0 0.0
        %1231 = vmatprep.subr.mxu0 0.0
        %1232 = vmatpush1.msra.mxu0 0.0
        %1233 = vmatprep.subr.mxu0 0.0
        %1234 = vmatpush1.msra.mxu0 0.0
        %1235 = vmatprep.subr.mxu0 0.0
        %1236 = vmatpush1.msra.mxu0 0.0
        %1237 = vmatprep.subr.mxu0 0.0
        %1238 = vmatpush1.msra.mxu0 0.0
        %1239 = vmatprep.subr.mxu0 0.0
        %1240 = vmatpush1.msra.mxu0 0.0
        %1241 = vmatprep.subr.mxu0 0.0
        %1242 = vmatpush1.msra.mxu0 0.0
        %1243 = vmatprep.subr.mxu0 0.0
        %1244 = vmatpush1.msra.mxu0 0.0
        %1245 = vmatprep.subr.mxu0 0.0
        %1246 = vmatpush1.msra.mxu0 0.0
        %1247 = vmatprep.subr.mxu0 0.0
        %1248 = vmatpush1.msra.mxu0 0.0
        %1249 = vmatprep.subr.mxu0 0.0
        %1250 = vmatpush1.msra.mxu0 0.0
        %1251 = vmatprep.subr.mxu0 0.0
        %1252 = vmatpush1.msra.mxu0 0.0
        %1253 = vmatprep.subr.mxu0 0.0
        %1254 = vmatpush1.msra.mxu0 0.0
        %1255 = vmatprep.subr.mxu0 0.0
        %1256 = vmatpush1.msra.mxu0 0.0
        %1257 = vmatprep.mubr.f32.mxu0 0.0
        %1258 = vmatmul.mubr.f32.gmra.mrb[0].mxu0 %v1191
        %v1259 = vpop.f32.mrb[0].mxu0
        %v1260 = vadd.f32 %v1188, %v1259
        %v1261 = vpop.f32.mrb[0].mxu0
        %1262 = vdwg.mxu0
        %v1263 = vadd.f32 %v1260, %v409
        %v1264 = vsel %vm423, %v1263, 0.0
        %1265 = vadd.xlane.f32.xlu0 %v1264
        %v1266 = vpop.xlane.xlu0 %1265
        %v1267 = vrcp.pop 32.0
        %v1268 = vmul.f32 %v1266, %v1267
        %v1269 = vsub.f32 %v1263, %v1268
        %v1270 = vmul.f32 %v1269, %v1269
        %v1271 = vsel %vm423, %v1270, 0.0
        %1272 = vadd.xlane.f32.xlu0 %v1271
        %v1273 = vpop.xlane.xlu0 %1272
        %v1274 = vmul.f32 %v1273, %v1267
        %v1275 = vadd.f32 %v1274, 1e-05
        %v1276 = vrsqrt.pop %v1275
        %v1277 = vmul.f32 %v1269, %v1276
        %v1279 = vlaneseq
        %v1280 = vshrl.u32 %v1279, 7
        %v1281 = vsub.s32 0, %v1280
        %v1282 = vrot.slane %v502, %v1281
        %v1284 = vmul.f32 %v1277, %v1282
        %v1286 = vlaneseq
        %v1287 = vshrl.u32 %v1286, 7
        %v1288 = vsub.s32 0, %v1287
        %v1289 = vrot.slane %v503, %v1288
        %v1291 = vadd.f32 %v1284, %v1289
        %1292 = vst.msk [vmem:[%s323] sm:$0xff] %vm423, %v1291
        %s1293 = sand.u32 %s225, 1
        %s1294 = scalar_lea.sflag [#allocation3], %s1293
        %s1295 = sand.u32 %s225, 1
        %s1296 = smul.addr %s1295, 8
        %s1297 = scalar_lea.vmem [#allocation2], %s1296
        // Predicated region
        $region57: #{attention_layer.1} parent=55 // pred_check
          %p1298 = pneg %p235
        $region58: #{attention_layer.1} parent=55 // pred_check_branch
          %1300 = sbr.rel (%p1298) target = $region60
        $region59: #{attention_layer.1} parent=55 // pred_region
          %s1302 = ssub.s32 128, 128
          %1303 = vsyncadd %s1294, %s1302
          %s1304 = smul.addr %s23, 128
          %s1305 = scalar_lea.hbm %s9, %s1304
          %s1307 = sshll.u32 %s1297, 4
          %s1308 = int_to_ptr.vmem [resolvable:$true] %s1307
          %1310 = dma.vmem_to_hbm [thread:$0]  %s1308, 128, %s1305, %s1294
        $region60: #{attention_layer.1} parent=55 // pred_fallthru
          _
      $region56: #{attention_layer.1} parent=5 // pred_fallthru
        _
      %p1311 = scmp.le.s32.totalorder 2, %s18
      // Predicated region
      $region61: #{attention_layer.1} parent=5 // pred_check
        %p1312 = pneg %p1311
      $region62: #{attention_layer.1} parent=5 // pred_check_branch
        %1314 = sbr.rel (%p1312) target = $region64
      $region63: #{attention_layer.1} parent=5 // pred_region
        %s1315 = ssub.s32 %s18, 2
        // Predicated region
        $region65: #{attention_layer.1} parent=63 // pred_check
          %p1316 = pneg %p241
        $region66: #{attention_layer.1} parent=63 // pred_check_branch
          %1318 = sbr.rel (%p1316) target = $region68
        $region67: #{attention_layer.1} parent=63 // pred_region
          %s1319 = sand.u32 %s226, 1
          %s1320 = scalar_lea.sflag [#allocation3], %s1319
          %s1321 = sand.u32 %s226, 1
          %s1322 = smul.addr %s1321, 8
          %s1323 = scalar_lea.vmem [#allocation2], %s1322
          %1324 = dma.done %s1320, 128
        $region68: #{attention_layer.1} parent=63 // pred_fallthru
          _
      $region64: #{attention_layer.1} parent=5 // pred_fallthru
        _
    $region6: #{attention_layer.1} parent=1 // loop_footer
      %s22 = sadd.s32 1, %s18
    $region7: #{attention_layer.1} parent=1 // loop_footer_branch
      %17 = sbr.rel target = $region3
    $region8: #{attention_layer.1} parent=1 // loop_exit
      _
    %1325 = vsyncpa [#allocation3], 1
    %s1326 = scalar_lea.sflag [#allocation3], 1
    %1327 = vsyncpa %s1326, 1

</llo_original>
